<compile_context>
chip_gen: v7x
topology: tpu7x:2x2x1
jax: 0.10.0
libtpu: 0.0.40
codegen_flags: <defaults>
</compile_context>

<pallas_src>
import jax
import jax.numpy as jnp
from jax.experimental import pallas as pl
from jax.experimental.pallas import tpu as pltpu

# ----- model / problem constants (the PyTorch module uses module defaults and
#       the undefined globals conditioning_range / prediction_range; fixed) ---
EMBEDDING_SIZE = 20
INPUT_SIZE = 3
HIDDEN_SIZE = 40
CONDITIONING_RANGE = 4
PREDICTION_RANGE = 4
TOTAL_STEPS = CONDITIONING_RANGE + PREDICTION_RANGE

GATE_PAD = 128                     # per-gate lane padding (H=40 -> 128)
GATE_COLS = 4 * GATE_PAD           # 512
SEQ_LANES = 8                      # packed lanes: [z, xc0, xc1, xc2, eps, 0, 0, 0]
SLAB_ROWS = HIDDEN_SIZE + 16       # 56, multiple of 8
SLAB_COLS = GATE_COLS + GATE_PAD   # 640: 4*128 gate block + 128 head block


# --------------------------------------------------------------------------
# Kernel
# --------------------------------------------------------------------------
def _deepar_kernel(seq_ref, w_ref, out_ref):
    H, HP, G = HIDDEN_SIZE, GATE_PAD, GATE_COLS
    Tc, P, T = CONDITIONING_RANGE, PREDICTION_RANGE, TOTAL_STEPS
    B = out_ref.shape[0]

    # ---- static slices of the packed weight slab --------------------------
    whh = w_ref[0:H, 0:G]                      # (40, 512) recurrent weights (gate-padded)
    wfull = w_ref[0:H, :]                      # (40, 640) = [ Whh | head ] fused
    wseq = w_ref[H:H + SEQ_LANES, 0:G]         # (8, 512)  covariate rows (seq lanes 1..3)
    w_zg = w_ref[H + 8:H + 9, 0:G]             # (1, 512)  embedding folded into gates
    b_g = w_ref[H + 9:H + 10, 0:G]             # (1, 512)  be@Wih_e + b_ih + b_hh (padded)
    b_head = w_ref[H + 8:H + 9, G:SLAB_COLS]   # (1, 128)  [bmu, bsig, 0, ...]

    def sigmoid(x):
        # tanh form: one EUP op instead of exp + divide
        return 0.5 * (jnp.tanh(0.5 * x) + 1.0)

    def softplus(x):
        return jnp.maximum(x, 0.0) + jnp.log(1.0 + jnp.exp(-jnp.abs(x)))

    seq = seq_ref[...]                                       # (T*B, 8)

    # Batched covariate contribution + fused LSTM bias for ALL steps in one
    # MXU push; entirely independent of the recurrence.
    gx_all = jnp.dot(seq, wseq,
                     preferred_element_type=jnp.float32) + b_g   # (T*B, 512)

    gx = [gx_all[t * B:(t + 1) * B, :] for t in range(T)]        # each (B, 512)
    z_cols = [seq[t * B:(t + 1) * B, 0:1] for t in range(Tc)]    # each (B, 1)
    eps_cols = [seq[t * B:(t + 1) * B, 4:5] for t in range(Tc, T)]

    # v = mean(z1 over time) + 1 ; inv_v hoisted out of the recurrence
    v = z_cols[0]
    for t in range(1, Tc):
        v = v + z_cols[t]
    v = v * (1.0 / Tc) + 1.0                                 # (B, 1)
    inv_v = pl.reciprocal(v, approx=False)                   # (B, 1)

    def activate(gates, c):
        # gates layout: [ i | f | g | o ], each gate padded to 128 lanes.
        i = sigmoid(gates[:, 0 * HP:1 * HP])
        f = sigmoid(gates[:, 1 * HP:2 * HP])
        g = jnp.tanh(gates[:, 2 * HP:3 * HP])
        o = sigmoid(gates[:, 3 * HP:4 * HP])
        c_new = f * c + i * g                                # padded lanes stay exactly 0
        h_new = o * jnp.tanh(c_new)                          # padded lanes stay exactly 0
        return h_new, c_new

    c = jnp.zeros((B, HP), jnp.float32)
    rec = jnp.zeros((B, G), jnp.float32)                     # h0 @ Whh with h0 == 0

    # ---------- conditioning phase: t = 1 .. CONDITIONING_RANGE - 1 --------
    for t in range(1, Tc):
        gates = gx[t] + rec + (z_cols[t - 1] * inv_v) * w_zg  # (B, 512)
        h, c = activate(gates, c)
        rec = jnp.dot(h[:, 0:H], whh, preferred_element_type=jnp.float32)

    # ---------- prediction phase -------------------------------------------
    y = z_cols[Tc - 1]                                        # z1[:, -1, :]
    outs, mus, sigs = [], [], []
    for k in range(P):
        t = Tc + k
        gates = gx[t] + rec + (y * inv_v) * w_zg
        h, c = activate(gates, c)
        # One fused MXU push: next-step recurrent term + mu/sigma head.
        hw = jnp.dot(h[:, 0:H], wfull,
                     preferred_element_type=jnp.float32)      # (B, 640)
        head = hw[:, G:] + b_head                             # (B, 128)
        mu = head[:, 0:1]                                     # (B, 1)
        sigma = softplus(head[:, 1:2])                        # (B, 1)
        y = mu + sigma * eps_cols[k]                          # Normal(mu, sigma).sample()
        outs.append(y * v)
        mus.append(mu * v)
        sigs.append(sigma * v)
        rec = hw[:, 0:G]                                      # carried to next step

    # single lane-packed writeback: [ y*v (P) | mu*v (P) | sigma*v (P) ]
    out_ref[...] = jnp.concatenate(outs + mus + sigs, axis=1)  # (B, 3P)


# --------------------------------------------------------------------------
# Host-side packing (parameter preprocessing only; all per-input compute
# stays inside the kernel)
# --------------------------------------------------------------------------
def _pad_gates(w):
    """(..., 4H) with gate order [i|f|g|o]  ->  (..., 4*GATE_PAD), 128-lane/gate."""
    H, HP = HIDDEN_SIZE, GATE_PAD
    parts = []
    for g in range(4):
        blk = w[..., g * H:(g + 1) * H]
        blk = jnp.pad(blk, [(0, 0)] * (w.ndim - 1) + [(0, HP - H)])
        parts.append(blk)
    return jnp.concatenate(parts, axis=-1)


def pack_weights(p):
    """Pack all parameters into one (56, 640) f32 slab (single input DMA)."""
    E, I, H, HP, G = EMBEDDING_SIZE, INPUT_SIZE, HIDDEN_SIZE, GATE_PAD, GATE_COLS

    wih_e = p["wih"][:E, :]                        # (E, 4H)
    wih_x = p["wih"][E:, :]                        # (I, 4H)

    w_zg = _pad_gates(p["we"] @ wih_e)             # (1, 512) embedding folded into gates
    b_g = _pad_gates(p["be"] @ wih_e + p["blstm"]) # (1, 512)
    whh_g = _pad_gates(p["whh"])                   # (H, 512)

    wseq = jnp.zeros((SEQ_LANES, G), jnp.float32)
    wseq = wseq.at[1:1 + I, :].set(_pad_gates(wih_x))   # seq lanes 1..3 carry xc

    whead = jnp.zeros((H, HP), jnp.float32)
    whead = whead.at[:, 0:1].set(p["wmu"])
    whead = whead.at[:, 1:2].set(p["wsig"])
    bhead = jnp.zeros((1, HP), jnp.float32)
    bhead = bhead.at[:, 0:1].set(p["bmu"])
    bhead = bhead.at[:, 1:2].set(p["bsig"])

    slab = jnp.zeros((SLAB_ROWS, SLAB_COLS), jnp.float32)
    slab = slab.at[0:H, 0:G].set(whh_g)
    slab = slab.at[0:H, G:SLAB_COLS].set(whead)
    slab = slab.at[H:H + 8, 0:G].set(wseq)
    slab = slab.at[H + 8, 0:G].set(w_zg[0])
    slab = slab.at[H + 9, 0:G].set(b_g[0])
    slab = slab.at[H + 8, G:SLAB_COLS].set(bhead[0])
    return slab


def pack_sequence(z1, xc, eps):
    """Packed (T*B, 8) sequence: row t*B+b; lane0=z, lanes1:4=xc, lane4=eps."""
    B = z1.shape[0]
    T = TOTAL_STEPS
    seq = jnp.zeros((T, B, SEQ_LANES), jnp.float32)
    seq = seq.at[:CONDITIONING_RANGE, :, 0:1].set(jnp.transpose(z1, (1, 0, 2)))
    seq = seq.at[:, :, 1:1 + INPUT_SIZE].set(jnp.transpose(xc, (1, 0, 2)))
    seq = seq.at[CONDITIONING_RANGE:, :, 4:5].set(jnp.transpose(eps, (1, 0, 2)))
    return seq.reshape(T * B, SEQ_LANES)


def deepar_forward(z1, xc, eps, params):
    """z1: (B, T_cond, 1), xc: (B, T_cond+P, 3), eps: (B, P, 1) std-normal noise."""
    B = z1.shape[0]
    P = PREDICTION_RANGE

    seq = pack_sequence(z1.astype(jnp.float32), xc.astype(jnp.float32),
                        eps.astype(jnp.float32))
    slab = pack_weights(params)

    vmem = pl.BlockSpec(memory_space=pltpu.MemorySpace.VMEM)
    # NOTE: at B=2 the whole problem fits one TensorCore; for large batches add
    # a grid over B-tiles with dimension_semantics=("parallel",) to use both
    # TensorCores on v7x.
    out = pl.pallas_call(
        _deepar_kernel,
        out_shape=jax.ShapeDtypeStruct((B, 3 * P), jnp.float32),
        in_specs=[vmem, vmem],
        out_specs=vmem,
    )(seq, slab)

    outputs = out[:, 0:P][..., None]          # (B, P, 1)
    mus = out[:, P:2 * P][..., None]
    sigmas = out[:, 2 * P:3 * P][..., None]
    return outputs, mus, sigmas


# --------------------------------------------------------------------------
# Pure-JAX reference (mirrors the PyTorch module) and parameter init
# --------------------------------------------------------------------------
def deepar_reference(z1, xc, eps, p):
    E, H = EMBEDDING_SIZE, HIDDEN_SIZE
    B = z1.shape[0]
    v = jnp.mean(z1, axis=1) + 1.0                         # (B, 1)

    def cell(x, h, c):                                      # x: (B, E+I)
        gates = x @ p["wih"] + h @ p["whh"] + p["blstm"]
        i = jax.nn.sigmoid(gates[:, 0:H])
        f = jax.nn.sigmoid(gates[:, H:2 * H])
        g = jnp.tanh(gates[:, 2 * H:3 * H])
        o = jax.nn.sigmoid(gates[:, 3 * H:4 * H])
        c = f * c + i * g
        h = o * jnp.tanh(c)
        return h, c

    def embed(z):                                           # (B, 1)
        return (z / v) @ p["we"] + p["be"]

    h = jnp.zeros((B, H), jnp.float32)
    c = jnp.zeros((B, H), jnp.float32)
    for t in range(1, CONDITIONING_RANGE):
        x = jnp.concatenate([embed(z1[:, t - 1, :]), xc[:, t, :]], axis=-1)
        h, c = cell(x, h, c)

    y = z1[:, -1, :]
    outs, mus, sigs = [], [], []
    for k in range(PREDICTION_RANGE):
        t = CONDITIONING_RANGE + k
        x = jnp.concatenate([embed(y), xc[:, t, :]], axis=-1)
        h, c = cell(x, h, c)
        mu = h @ p["wmu"] + p["bmu"]
        sigma = jax.nn.softplus(h @ p["wsig"] + p["bsig"])
        y = mu + sigma * eps[:, k, :]
        outs.append(y * v)
        mus.append(mu * v)
        sigs.append(sigma * v)
    stack = lambda xs: jnp.stack(xs, axis=1)                # (B, P, 1)
    return stack(outs), stack(mus), stack(sigs)


def init_params(key):
    E, I, H = EMBEDDING_SIZE, INPUT_SIZE, HIDDEN_SIZE
    ks = jax.random.split(key, 10)

    def u(k, shape, fan_in):
        b = 1.0 / jnp.sqrt(jnp.float32(fan_in))
        return jax.random.uniform(k, shape, jnp.float32, -b, b)

    return {
        "we": u(ks[0], (1, E), 1),              # embedding.weight.T
        "be": u(ks[1], (1, E), 1),              # embedding.bias
        "wih": u(ks[2], (E + I, 4 * H), H),     # lstm.weight_ih_l0.T  (gate order i|f|g|o)
        "whh": u(ks[3], (H, 4 * H), H),         # lstm.weight_hh_l0.T
        "blstm": u(ks[4], (1, 4 * H), H) + u(ks[5], (1, 4 * H), H),   # b_ih + b_hh
        "wmu": u(ks[6], (H, 1), H),             # gaussian_mu.weight.T
        "bmu": u(ks[7], (1, 1), H),
        "wsig": u(ks[8], (H, 1), H),            # gaussian_sigma[0].weight.T
        "bsig": u(ks[9], (1, 1), H),
    }


if __name__ == "__main__":
    key = jax.random.PRNGKey(0)
    kp, kz, kx, ke = jax.random.split(key, 4)

    params = init_params(kp)

    B = 2
    # z1 >= 0 so the DeepAR scale v = mean(z1)+1 is strictly positive (the
    # module scales sigma by v; with a positive-target series sigma*v > 0).
    z1 = jax.random.uniform(kz, (B, CONDITIONING_RANGE, 1), jnp.float32)
    xc = jax.random.normal(
        kx, (B, CONDITIONING_RANGE + PREDICTION_RANGE, INPUT_SIZE), jnp.float32)
    eps = jax.random.normal(ke, (B, PREDICTION_RANGE, 1), jnp.float32)

    # TODO(synk): torch.distributions.Normal(...).sample() uses device RNG;
    # here sampling is reparameterized with host-supplied standard-normal eps.
    outputs, mus, sigmas = jax.jit(deepar_forward)(z1, xc, eps, params)
    jax.block_until_ready((outputs, mus, sigmas))

    ref_out, ref_mu, ref_sig = deepar_reference(z1, xc, eps, params)

    assert outputs.shape == (B, PREDICTION_RANGE, 1)
    assert mus.shape == (B, PREDICTION_RANGE, 1)
    assert sigmas.shape == (B, PREDICTION_RANGE, 1)
    assert bool(jnp.all(jnp.isfinite(outputs)))
    assert bool(jnp.all(sigmas > 0))
    assert bool(jnp.allclose(outputs, ref_out, atol=1e-4, rtol=1e-4))
    assert bool(jnp.allclose(mus, ref_mu, atol=1e-4, rtol=1e-4))
    assert bool(jnp.allclose(sigmas, ref_sig, atol=1e-4, rtol=1e-4))
    print("KERNEL_OK")
</pallas_src>

<mosaic_0001>
module attributes {stable_mosaic.version = 11 : i64} {
  func.func @_deepar_kernel(%arg0: memref<16x8xf32, #tpu.memory_space<vmem>>, %arg1: memref<56x640xf32, #tpu.memory_space<vmem>>, %arg2: memref<2x12xf32, #tpu.memory_space<vmem>>) attributes {dimension_semantics = [], scalar_prefetch = 0 : i64, scratch_operands = 0 : i64, tpu.core_type = #tpu.core_type<tc>} {
    %c0 = arith.constant 0 : index
    %c0_0 = arith.constant 0 : index
    %0 = vector.load %arg1[%c0, %c0_0] : memref<56x640xf32, #tpu.memory_space<vmem>>, vector<40x512xf32>
    %c0_1 = arith.constant 0 : index
    %c0_2 = arith.constant 0 : index
    %1 = vector.load %arg1[%c0_1, %c0_2] : memref<56x640xf32, #tpu.memory_space<vmem>>, vector<40x640xf32>
    %c40 = arith.constant 40 : index
    %c0_3 = arith.constant 0 : index
    %2 = vector.load %arg1[%c40, %c0_3] : memref<56x640xf32, #tpu.memory_space<vmem>>, vector<8x512xf32>
    %c48 = arith.constant 48 : index
    %c0_4 = arith.constant 0 : index
    %3 = vector.load %arg1[%c48, %c0_4] : memref<56x640xf32, #tpu.memory_space<vmem>>, vector<1x512xf32>
    %c49 = arith.constant 49 : index
    %c0_5 = arith.constant 0 : index
    %4 = vector.load %arg1[%c49, %c0_5] : memref<56x640xf32, #tpu.memory_space<vmem>>, vector<1x512xf32>
    %c48_6 = arith.constant 48 : index
    %c512 = arith.constant 512 : index
    %5 = vector.load %arg1[%c48_6, %c512] : memref<56x640xf32, #tpu.memory_space<vmem>>, vector<1x128xf32>
    %c0_7 = arith.constant 0 : index
    %c0_8 = arith.constant 0 : index
    %6 = vector.load %arg0[%c0_7, %c0_8] : memref<16x8xf32, #tpu.memory_space<vmem>>, vector<16x8xf32>
    %cst = arith.constant dense<0.000000e+00> : vector<16x512xf32>
    %7 = tpu.matmul %6, %2, %cst {dimension_numbers = #tpu.dot_dimension_numbers<[1], [0], [0], [1], [0, 0, 1, 1], [], []>} : vector<16x8xf32>, vector<8x512xf32>, vector<16x512xf32> -> vector<16x512xf32>
    %8 = vector.broadcast %4 : vector<1x512xf32> to vector<16x512xf32>
    %9 = arith.addf %7, %8 : vector<16x512xf32>
    %10 = vector.extract_strided_slice %9 {offsets = [2, 0], sizes = [2, 512], strides = [1, 1]} : vector<16x512xf32> to vector<2x512xf32>
    %11 = vector.extract_strided_slice %9 {offsets = [4, 0], sizes = [2, 512], strides = [1, 1]} : vector<16x512xf32> to vector<2x512xf32>
    %12 = vector.extract_strided_slice %9 {offsets = [6, 0], sizes = [2, 512], strides = [1, 1]} : vector<16x512xf32> to vector<2x512xf32>
    %13 = vector.extract_strided_slice %9 {offsets = [8, 0], sizes = [2, 512], strides = [1, 1]} : vector<16x512xf32> to vector<2x512xf32>
    %14 = vector.extract_strided_slice %9 {offsets = [10, 0], sizes = [2, 512], strides = [1, 1]} : vector<16x512xf32> to vector<2x512xf32>
    %15 = vector.extract_strided_slice %9 {offsets = [12, 0], sizes = [2, 512], strides = [1, 1]} : vector<16x512xf32> to vector<2x512xf32>
    %16 = vector.extract_strided_slice %9 {offsets = [14, 0], sizes = [2, 512], strides = [1, 1]} : vector<16x512xf32> to vector<2x512xf32>
    %17 = vector.extract_strided_slice %6 {offsets = [0, 0], sizes = [2, 1], strides = [1, 1]} : vector<16x8xf32> to vector<2x1xf32>
    %18 = vector.extract_strided_slice %6 {offsets = [2, 0], sizes = [2, 1], strides = [1, 1]} : vector<16x8xf32> to vector<2x1xf32>
    %19 = vector.extract_strided_slice %6 {offsets = [4, 0], sizes = [2, 1], strides = [1, 1]} : vector<16x8xf32> to vector<2x1xf32>
    %20 = vector.extract_strided_slice %6 {offsets = [6, 0], sizes = [2, 1], strides = [1, 1]} : vector<16x8xf32> to vector<2x1xf32>
    %21 = vector.extract_strided_slice %6 {offsets = [8, 4], sizes = [2, 1], strides = [1, 1]} : vector<16x8xf32> to vector<2x1xf32>
    %22 = vector.extract_strided_slice %6 {offsets = [10, 4], sizes = [2, 1], strides = [1, 1]} : vector<16x8xf32> to vector<2x1xf32>
    %23 = vector.extract_strided_slice %6 {offsets = [12, 4], sizes = [2, 1], strides = [1, 1]} : vector<16x8xf32> to vector<2x1xf32>
    %24 = vector.extract_strided_slice %6 {offsets = [14, 4], sizes = [2, 1], strides = [1, 1]} : vector<16x8xf32> to vector<2x1xf32>
    %25 = arith.addf %17, %18 : vector<2x1xf32>
    %26 = arith.addf %25, %19 : vector<2x1xf32>
    %27 = arith.addf %26, %20 : vector<2x1xf32>
    %cst_9 = arith.constant 2.500000e-01 : f32
    %28 = vector.broadcast %cst_9 : f32 to vector<2x1xf32>
    %29 = arith.mulf %27, %28 : vector<2x1xf32>
    %cst_10 = arith.constant 1.000000e+00 : f32
    %30 = vector.broadcast %cst_10 : f32 to vector<2x1xf32>
    %31 = arith.addf %29, %30 : vector<2x1xf32>
    %32 = tpu.reciprocal %31 : vector<2x1xf32> -> vector<2x1xf32>
    %cst_11 = arith.constant 0.000000e+00 : f32
    %33 = vector.broadcast %cst_11 : f32 to vector<2x128xf32>
    %cst_12 = arith.constant 0.000000e+00 : f32
    %34 = vector.broadcast %cst_12 : f32 to vector<2x512xf32>
    %35 = arith.addf %10, %34 : vector<2x512xf32>
    %36 = arith.mulf %17, %32 : vector<2x1xf32>
    %37 = vector.broadcast %36 : vector<2x1xf32> to vector<2x512xf32>
    %38 = vector.broadcast %3 : vector<1x512xf32> to vector<2x512xf32>
    %39 = arith.mulf %37, %38 : vector<2x512xf32>
    %40 = arith.addf %35, %39 : vector<2x512xf32>
    %41 = vector.extract_strided_slice %40 {offsets = [0, 0], sizes = [2, 128], strides = [1, 1]} : vector<2x512xf32> to vector<2x128xf32>
    %cst_13 = arith.constant 5.000000e-01 : f32
    %42 = vector.broadcast %cst_13 : f32 to vector<2x128xf32>
    %43 = arith.mulf %42, %41 : vector<2x128xf32>
    %44 = math.tanh %43 : vector<2x128xf32>
    %cst_14 = arith.constant 1.000000e+00 : f32
    %45 = vector.broadcast %cst_14 : f32 to vector<2x128xf32>
    %46 = arith.addf %44, %45 : vector<2x128xf32>
    %cst_15 = arith.constant 5.000000e-01 : f32
    %47 = vector.broadcast %cst_15 : f32 to vector<2x128xf32>
    %48 = arith.mulf %47, %46 : vector<2x128xf32>
    %49 = vector.extract_strided_slice %40 {offsets = [0, 128], sizes = [2, 128], strides = [1, 1]} : vector<2x512xf32> to vector<2x128xf32>
    %cst_16 = arith.constant 5.000000e-01 : f32
    %50 = vector.broadcast %cst_16 : f32 to vector<2x128xf32>
    %51 = arith.mulf %50, %49 : vector<2x128xf32>
    %52 = math.tanh %51 : vector<2x128xf32>
    %cst_17 = arith.constant 1.000000e+00 : f32
    %53 = vector.broadcast %cst_17 : f32 to vector<2x128xf32>
    %54 = arith.addf %52, %53 : vector<2x128xf32>
    %cst_18 = arith.constant 5.000000e-01 : f32
    %55 = vector.broadcast %cst_18 : f32 to vector<2x128xf32>
    %56 = arith.mulf %55, %54 : vector<2x128xf32>
    %57 = vector.extract_strided_slice %40 {offsets = [0, 256], sizes = [2, 128], strides = [1, 1]} : vector<2x512xf32> to vector<2x128xf32>
    %58 = math.tanh %57 : vector<2x128xf32>
    %59 = vector.extract_strided_slice %40 {offsets = [0, 384], sizes = [2, 128], strides = [1, 1]} : vector<2x512xf32> to vector<2x128xf32>
    %cst_19 = arith.constant 5.000000e-01 : f32
    %60 = vector.broadcast %cst_19 : f32 to vector<2x128xf32>
    %61 = arith.mulf %60, %59 : vector<2x128xf32>
    %62 = math.tanh %61 : vector<2x128xf32>
    %cst_20 = arith.constant 1.000000e+00 : f32
    %63 = vector.broadcast %cst_20 : f32 to vector<2x128xf32>
    %64 = arith.addf %62, %63 : vector<2x128xf32>
    %cst_21 = arith.constant 5.000000e-01 : f32
    %65 = vector.broadcast %cst_21 : f32 to vector<2x128xf32>
    %66 = arith.mulf %65, %64 : vector<2x128xf32>
    %67 = arith.mulf %56, %33 : vector<2x128xf32>
    %68 = arith.mulf %48, %58 : vector<2x128xf32>
    %69 = arith.addf %67, %68 : vector<2x128xf32>
    %70 = math.tanh %69 : vector<2x128xf32>
    %71 = arith.mulf %66, %70 : vector<2x128xf32>
    %72 = vector.extract_strided_slice %71 {offsets = [0, 0], sizes = [2, 40], strides = [1, 1]} : vector<2x128xf32> to vector<2x40xf32>
    %cst_22 = arith.constant dense<0.000000e+00> : vector<2x512xf32>
    %73 = tpu.matmul %72, %0, %cst_22 {dimension_numbers = #tpu.dot_dimension_numbers<[1], [0], [0], [1], [0, 0, 1, 1], [], []>} : vector<2x40xf32>, vector<40x512xf32>, vector<2x512xf32> -> vector<2x512xf32>
    %74 = arith.addf %11, %73 : vector<2x512xf32>
    %75 = arith.mulf %18, %32 : vector<2x1xf32>
    %76 = vector.broadcast %75 : vector<2x1xf32> to vector<2x512xf32>
    %77 = vector.broadcast %3 : vector<1x512xf32> to vector<2x512xf32>
    %78 = arith.mulf %76, %77 : vector<2x512xf32>
    %79 = arith.addf %74, %78 : vector<2x512xf32>
    %80 = vector.extract_strided_slice %79 {offsets = [0, 0], sizes = [2, 128], strides = [1, 1]} : vector<2x512xf32> to vector<2x128xf32>
    %cst_23 = arith.constant 5.000000e-01 : f32
    %81 = vector.broadcast %cst_23 : f32 to vector<2x128xf32>
    %82 = arith.mulf %81, %80 : vector<2x128xf32>
    %83 = math.tanh %82 : vector<2x128xf32>
    %cst_24 = arith.constant 1.000000e+00 : f32
    %84 = vector.broadcast %cst_24 : f32 to vector<2x128xf32>
    %85 = arith.addf %83, %84 : vector<2x128xf32>
    %cst_25 = arith.constant 5.000000e-01 : f32
    %86 = vector.broadcast %cst_25 : f32 to vector<2x128xf32>
    %87 = arith.mulf %86, %85 : vector<2x128xf32>
    %88 = vector.extract_strided_slice %79 {offsets = [0, 128], sizes = [2, 128], strides = [1, 1]} : vector<2x512xf32> to vector<2x128xf32>
    %cst_26 = arith.constant 5.000000e-01 : f32
    %89 = vector.broadcast %cst_26 : f32 to vector<2x128xf32>
    %90 = arith.mulf %89, %88 : vector<2x128xf32>
    %91 = math.tanh %90 : vector<2x128xf32>
    %cst_27 = arith.constant 1.000000e+00 : f32
    %92 = vector.broadcast %cst_27 : f32 to vector<2x128xf32>
    %93 = arith.addf %91, %92 : vector<2x128xf32>
    %cst_28 = arith.constant 5.000000e-01 : f32
    %94 = vector.broadcast %cst_28 : f32 to vector<2x128xf32>
    %95 = arith.mulf %94, %93 : vector<2x128xf32>
    %96 = vector.extract_strided_slice %79 {offsets = [0, 256], sizes = [2, 128], strides = [1, 1]} : vector<2x512xf32> to vector<2x128xf32>
    %97 = math.tanh %96 : vector<2x128xf32>
    %98 = vector.extract_strided_slice %79 {offsets = [0, 384], sizes = [2, 128], strides = [1, 1]} : vector<2x512xf32> to vector<2x128xf32>
    %cst_29 = arith.constant 5.000000e-01 : f32
    %99 = vector.broadcast %cst_29 : f32 to vector<2x128xf32>
    %100 = arith.mulf %99, %98 : vector<2x128xf32>
    %101 = math.tanh %100 : vector<2x128xf32>
    %cst_30 = arith.constant 1.000000e+00 : f32
    %102 = vector.broadcast %cst_30 : f32 to vector<2x128xf32>
    %103 = arith.addf %101, %102 : vector<2x128xf32>
    %cst_31 = arith.constant 5.000000e-01 : f32
    %104 = vector.broadcast %cst_31 : f32 to vector<2x128xf32>
    %105 = arith.mulf %104, %103 : vector<2x128xf32>
    %106 = arith.mulf %95, %69 : vector<2x128xf32>
    %107 = arith.mulf %87, %97 : vector<2x128xf32>
    %108 = arith.addf %106, %107 : vector<2x128xf32>
    %109 = math.tanh %108 : vector<2x128xf32>
    %110 = arith.mulf %105, %109 : vector<2x128xf32>
    %111 = vector.extract_strided_slice %110 {offsets = [0, 0], sizes = [2, 40], strides = [1, 1]} : vector<2x128xf32> to vector<2x40xf32>
    %cst_32 = arith.constant dense<0.000000e+00> : vector<2x512xf32>
    %112 = tpu.matmul %111, %0, %cst_32 {dimension_numbers = #tpu.dot_dimension_numbers<[1], [0], [0], [1], [0, 0, 1, 1], [], []>} : vector<2x40xf32>, vector<40x512xf32>, vector<2x512xf32> -> vector<2x512xf32>
    %113 = arith.addf %12, %112 : vector<2x512xf32>
    %114 = arith.mulf %19, %32 : vector<2x1xf32>
    %115 = vector.broadcast %114 : vector<2x1xf32> to vector<2x512xf32>
    %116 = vector.broadcast %3 : vector<1x512xf32> to vector<2x512xf32>
    %117 = arith.mulf %115, %116 : vector<2x512xf32>
    %118 = arith.addf %113, %117 : vector<2x512xf32>
    %119 = vector.extract_strided_slice %118 {offsets = [0, 0], sizes = [2, 128], strides = [1, 1]} : vector<2x512xf32> to vector<2x128xf32>
    %cst_33 = arith.constant 5.000000e-01 : f32
    %120 = vector.broadcast %cst_33 : f32 to vector<2x128xf32>
    %121 = arith.mulf %120, %119 : vector<2x128xf32>
    %122 = math.tanh %121 : vector<2x128xf32>
    %cst_34 = arith.constant 1.000000e+00 : f32
    %123 = vector.broadcast %cst_34 : f32 to vector<2x128xf32>
    %124 = arith.addf %122, %123 : vector<2x128xf32>
    %cst_35 = arith.constant 5.000000e-01 : f32
    %125 = vector.broadcast %cst_35 : f32 to vector<2x128xf32>
    %126 = arith.mulf %125, %124 : vector<2x128xf32>
    %127 = vector.extract_strided_slice %118 {offsets = [0, 128], sizes = [2, 128], strides = [1, 1]} : vector<2x512xf32> to vector<2x128xf32>
    %cst_36 = arith.constant 5.000000e-01 : f32
    %128 = vector.broadcast %cst_36 : f32 to vector<2x128xf32>
    %129 = arith.mulf %128, %127 : vector<2x128xf32>
    %130 = math.tanh %129 : vector<2x128xf32>
    %cst_37 = arith.constant 1.000000e+00 : f32
    %131 = vector.broadcast %cst_37 : f32 to vector<2x128xf32>
    %132 = arith.addf %130, %131 : vector<2x128xf32>
    %cst_38 = arith.constant 5.000000e-01 : f32
    %133 = vector.broadcast %cst_38 : f32 to vector<2x128xf32>
    %134 = arith.mulf %133, %132 : vector<2x128xf32>
    %135 = vector.extract_strided_slice %118 {offsets = [0, 256], sizes = [2, 128], strides = [1, 1]} : vector<2x512xf32> to vector<2x128xf32>
    %136 = math.tanh %135 : vector<2x128xf32>
    %137 = vector.extract_strided_slice %118 {offsets = [0, 384], sizes = [2, 128], strides = [1, 1]} : vector<2x512xf32> to vector<2x128xf32>
    %cst_39 = arith.constant 5.000000e-01 : f32
    %138 = vector.broadcast %cst_39 : f32 to vector<2x128xf32>
    %139 = arith.mulf %138, %137 : vector<2x128xf32>
    %140 = math.tanh %139 : vector<2x128xf32>
    %cst_40 = arith.constant 1.000000e+00 : f32
    %141 = vector.broadcast %cst_40 : f32 to vector<2x128xf32>
    %142 = arith.addf %140, %141 : vector<2x128xf32>
    %cst_41 = arith.constant 5.000000e-01 : f32
    %143 = vector.broadcast %cst_41 : f32 to vector<2x128xf32>
    %144 = arith.mulf %143, %142 : vector<2x128xf32>
    %145 = arith.mulf %134, %108 : vector<2x128xf32>
    %146 = arith.mulf %126, %136 : vector<2x128xf32>
    %147 = arith.addf %145, %146 : vector<2x128xf32>
    %148 = math.tanh %147 : vector<2x128xf32>
    %149 = arith.mulf %144, %148 : vector<2x128xf32>
    %150 = vector.extract_strided_slice %149 {offsets = [0, 0], sizes = [2, 40], strides = [1, 1]} : vector<2x128xf32> to vector<2x40xf32>
    %cst_42 = arith.constant dense<0.000000e+00> : vector<2x512xf32>
    %151 = tpu.matmul %150, %0, %cst_42 {dimension_numbers = #tpu.dot_dimension_numbers<[1], [0], [0], [1], [0, 0, 1, 1], [], []>} : vector<2x40xf32>, vector<40x512xf32>, vector<2x512xf32> -> vector<2x512xf32>
    %152 = arith.addf %13, %151 : vector<2x512xf32>
    %153 = arith.mulf %20, %32 : vector<2x1xf32>
    %154 = vector.broadcast %153 : vector<2x1xf32> to vector<2x512xf32>
    %155 = vector.broadcast %3 : vector<1x512xf32> to vector<2x512xf32>
    %156 = arith.mulf %154, %155 : vector<2x512xf32>
    %157 = arith.addf %152, %156 : vector<2x512xf32>
    %158 = vector.extract_strided_slice %157 {offsets = [0, 0], sizes = [2, 128], strides = [1, 1]} : vector<2x512xf32> to vector<2x128xf32>
    %cst_43 = arith.constant 5.000000e-01 : f32
    %159 = vector.broadcast %cst_43 : f32 to vector<2x128xf32>
    %160 = arith.mulf %159, %158 : vector<2x128xf32>
    %161 = math.tanh %160 : vector<2x128xf32>
    %cst_44 = arith.constant 1.000000e+00 : f32
    %162 = vector.broadcast %cst_44 : f32 to vector<2x128xf32>
    %163 = arith.addf %161, %162 : vector<2x128xf32>
    %cst_45 = arith.constant 5.000000e-01 : f32
    %164 = vector.broadcast %cst_45 : f32 to vector<2x128xf32>
    %165 = arith.mulf %164, %163 : vector<2x128xf32>
    %166 = vector.extract_strided_slice %157 {offsets = [0, 128], sizes = [2, 128], strides = [1, 1]} : vector<2x512xf32> to vector<2x128xf32>
    %cst_46 = arith.constant 5.000000e-01 : f32
    %167 = vector.broadcast %cst_46 : f32 to vector<2x128xf32>
    %168 = arith.mulf %167, %166 : vector<2x128xf32>
    %169 = math.tanh %168 : vector<2x128xf32>
    %cst_47 = arith.constant 1.000000e+00 : f32
    %170 = vector.broadcast %cst_47 : f32 to vector<2x128xf32>
    %171 = arith.addf %169, %170 : vector<2x128xf32>
    %cst_48 = arith.constant 5.000000e-01 : f32
    %172 = vector.broadcast %cst_48 : f32 to vector<2x128xf32>
    %173 = arith.mulf %172, %171 : vector<2x128xf32>
    %174 = vector.extract_strided_slice %157 {offsets = [0, 256], sizes = [2, 128], strides = [1, 1]} : vector<2x512xf32> to vector<2x128xf32>
    %175 = math.tanh %174 : vector<2x128xf32>
    %176 = vector.extract_strided_slice %157 {offsets = [0, 384], sizes = [2, 128], strides = [1, 1]} : vector<2x512xf32> to vector<2x128xf32>
    %cst_49 = arith.constant 5.000000e-01 : f32
    %177 = vector.broadcast %cst_49 : f32 to vector<2x128xf32>
    %178 = arith.mulf %177, %176 : vector<2x128xf32>
    %179 = math.tanh %178 : vector<2x128xf32>
    %cst_50 = arith.constant 1.000000e+00 : f32
    %180 = vector.broadcast %cst_50 : f32 to vector<2x128xf32>
    %181 = arith.addf %179, %180 : vector<2x128xf32>
    %cst_51 = arith.constant 5.000000e-01 : f32
    %182 = vector.broadcast %cst_51 : f32 to vector<2x128xf32>
    %183 = arith.mulf %182, %181 : vector<2x128xf32>
    %184 = arith.mulf %173, %147 : vector<2x128xf32>
    %185 = arith.mulf %165, %175 : vector<2x128xf32>
    %186 = arith.addf %184, %185 : vector<2x128xf32>
    %187 = math.tanh %186 : vector<2x128xf32>
    %188 = arith.mulf %183, %187 : vector<2x128xf32>
    %189 = vector.extract_strided_slice %188 {offsets = [0, 0], sizes = [2, 40], strides = [1, 1]} : vector<2x128xf32> to vector<2x40xf32>
    %cst_52 = arith.constant dense<0.000000e+00> : vector<2x640xf32>
    %190 = tpu.matmul %189, %1, %cst_52 {dimension_numbers = #tpu.dot_dimension_numbers<[1], [0], [0], [1], [0, 0, 1, 1], [], []>} : vector<2x40xf32>, vector<40x640xf32>, vector<2x640xf32> -> vector<2x640xf32>
    %191 = vector.extract_strided_slice %190 {offsets = [0, 512], sizes = [2, 128], strides = [1, 1]} : vector<2x640xf32> to vector<2x128xf32>
    %192 = vector.broadcast %5 : vector<1x128xf32> to vector<2x128xf32>
    %193 = arith.addf %191, %192 : vector<2x128xf32>
    %194 = vector.extract_strided_slice %193 {offsets = [0, 0], sizes = [2, 1], strides = [1, 1]} : vector<2x128xf32> to vector<2x1xf32>
    %195 = vector.extract_strided_slice %193 {offsets = [0, 1], sizes = [2, 1], strides = [1, 1]} : vector<2x128xf32> to vector<2x1xf32>
    %cst_53 = arith.constant 0.000000e+00 : f32
    %196 = vector.broadcast %cst_53 : f32 to vector<2x1xf32>
    %197 = arith.maximumf %195, %196 : vector<2x1xf32>
    %198 = math.absf %195 : vector<2x1xf32>
    %cst_54 = arith.constant 0.000000e+00 : f32
    %199 = vector.broadcast %cst_54 : f32 to vector<2x1xf32>
    %200 = arith.subf %199, %198 : vector<2x1xf32>
    %201 = math.exp %200 : vector<2x1xf32>
    %cst_55 = arith.constant 1.000000e+00 : f32
    %202 = vector.broadcast %cst_55 : f32 to vector<2x1xf32>
    %203 = arith.addf %202, %201 : vector<2x1xf32>
    %204 = math.log %203 : vector<2x1xf32>
    %205 = arith.addf %197, %204 : vector<2x1xf32>
    %206 = arith.mulf %205, %21 : vector<2x1xf32>
    %207 = arith.addf %194, %206 : vector<2x1xf32>
    %208 = arith.mulf %207, %31 : vector<2x1xf32>
    %209 = arith.mulf %194, %31 : vector<2x1xf32>
    %210 = arith.mulf %205, %31 : vector<2x1xf32>
    %211 = vector.extract_strided_slice %190 {offsets = [0, 0], sizes = [2, 512], strides = [1, 1]} : vector<2x640xf32> to vector<2x512xf32>
    %212 = arith.addf %14, %211 : vector<2x512xf32>
    %213 = arith.mulf %207, %32 : vector<2x1xf32>
    %214 = vector.broadcast %213 : vector<2x1xf32> to vector<2x512xf32>
    %215 = vector.broadcast %3 : vector<1x512xf32> to vector<2x512xf32>
    %216 = arith.mulf %214, %215 : vector<2x512xf32>
    %217 = arith.addf %212, %216 : vector<2x512xf32>
    %218 = vector.extract_strided_slice %217 {offsets = [0, 0], sizes = [2, 128], strides = [1, 1]} : vector<2x512xf32> to vector<2x128xf32>
    %cst_56 = arith.constant 5.000000e-01 : f32
    %219 = vector.broadcast %cst_56 : f32 to vector<2x128xf32>
    %220 = arith.mulf %219, %218 : vector<2x128xf32>
    %221 = math.tanh %220 : vector<2x128xf32>
    %cst_57 = arith.constant 1.000000e+00 : f32
    %222 = vector.broadcast %cst_57 : f32 to vector<2x128xf32>
    %223 = arith.addf %221, %222 : vector<2x128xf32>
    %cst_58 = arith.constant 5.000000e-01 : f32
    %224 = vector.broadcast %cst_58 : f32 to vector<2x128xf32>
    %225 = arith.mulf %224, %223 : vector<2x128xf32>
    %226 = vector.extract_strided_slice %217 {offsets = [0, 128], sizes = [2, 128], strides = [1, 1]} : vector<2x512xf32> to vector<2x128xf32>
    %cst_59 = arith.constant 5.000000e-01 : f32
    %227 = vector.broadcast %cst_59 : f32 to vector<2x128xf32>
    %228 = arith.mulf %227, %226 : vector<2x128xf32>
    %229 = math.tanh %228 : vector<2x128xf32>
    %cst_60 = arith.constant 1.000000e+00 : f32
    %230 = vector.broadcast %cst_60 : f32 to vector<2x128xf32>
    %231 = arith.addf %229, %230 : vector<2x128xf32>
    %cst_61 = arith.constant 5.000000e-01 : f32
    %232 = vector.broadcast %cst_61 : f32 to vector<2x128xf32>
    %233 = arith.mulf %232, %231 : vector<2x128xf32>
    %234 = vector.extract_strided_slice %217 {offsets = [0, 256], sizes = [2, 128], strides = [1, 1]} : vector<2x512xf32> to vector<2x128xf32>
    %235 = math.tanh %234 : vector<2x128xf32>
    %236 = vector.extract_strided_slice %217 {offsets = [0, 384], sizes = [2, 128], strides = [1, 1]} : vector<2x512xf32> to vector<2x128xf32>
    %cst_62 = arith.constant 5.000000e-01 : f32
    %237 = vector.broadcast %cst_62 : f32 to vector<2x128xf32>
    %238 = arith.mulf %237, %236 : vector<2x128xf32>
    %239 = math.tanh %238 : vector<2x128xf32>
    %cst_63 = arith.constant 1.000000e+00 : f32
    %240 = vector.broadcast %cst_63 : f32 to vector<2x128xf32>
    %241 = arith.addf %239, %240 : vector<2x128xf32>
    %cst_64 = arith.constant 5.000000e-01 : f32
    %242 = vector.broadcast %cst_64 : f32 to vector<2x128xf32>
    %243 = arith.mulf %242, %241 : vector<2x128xf32>
    %244 = arith.mulf %233, %186 : vector<2x128xf32>
    %245 = arith.mulf %225, %235 : vector<2x128xf32>
    %246 = arith.addf %244, %245 : vector<2x128xf32>
    %247 = math.tanh %246 : vector<2x128xf32>
    %248 = arith.mulf %243, %247 : vector<2x128xf32>
    %249 = vector.extract_strided_slice %248 {offsets = [0, 0], sizes = [2, 40], strides = [1, 1]} : vector<2x128xf32> to vector<2x40xf32>
    %cst_65 = arith.constant dense<0.000000e+00> : vector<2x640xf32>
    %250 = tpu.matmul %249, %1, %cst_65 {dimension_numbers = #tpu.dot_dimension_numbers<[1], [0], [0], [1], [0, 0, 1, 1], [], []>} : vector<2x40xf32>, vector<40x640xf32>, vector<2x640xf32> -> vector<2x640xf32>
    %251 = vector.extract_strided_slice %250 {offsets = [0, 512], sizes = [2, 128], strides = [1, 1]} : vector<2x640xf32> to vector<2x128xf32>
    %252 = vector.broadcast %5 : vector<1x128xf32> to vector<2x128xf32>
    %253 = arith.addf %251, %252 : vector<2x128xf32>
    %254 = vector.extract_strided_slice %253 {offsets = [0, 0], sizes = [2, 1], strides = [1, 1]} : vector<2x128xf32> to vector<2x1xf32>
    %255 = vector.extract_strided_slice %253 {offsets = [0, 1], sizes = [2, 1], strides = [1, 1]} : vector<2x128xf32> to vector<2x1xf32>
    %cst_66 = arith.constant 0.000000e+00 : f32
    %256 = vector.broadcast %cst_66 : f32 to vector<2x1xf32>
    %257 = arith.maximumf %255, %256 : vector<2x1xf32>
    %258 = math.absf %255 : vector<2x1xf32>
    %cst_67 = arith.constant 0.000000e+00 : f32
    %259 = vector.broadcast %cst_67 : f32 to vector<2x1xf32>
    %260 = arith.subf %259, %258 : vector<2x1xf32>
    %261 = math.exp %260 : vector<2x1xf32>
    %cst_68 = arith.constant 1.000000e+00 : f32
    %262 = vector.broadcast %cst_68 : f32 to vector<2x1xf32>
    %263 = arith.addf %262, %261 : vector<2x1xf32>
    %264 = math.log %263 : vector<2x1xf32>
    %265 = arith.addf %257, %264 : vector<2x1xf32>
    %266 = arith.mulf %265, %22 : vector<2x1xf32>
    %267 = arith.addf %254, %266 : vector<2x1xf32>
    %268 = arith.mulf %267, %31 : vector<2x1xf32>
    %269 = arith.mulf %254, %31 : vector<2x1xf32>
    %270 = arith.mulf %265, %31 : vector<2x1xf32>
    %271 = vector.extract_strided_slice %250 {offsets = [0, 0], sizes = [2, 512], strides = [1, 1]} : vector<2x640xf32> to vector<2x512xf32>
    %272 = arith.addf %15, %271 : vector<2x512xf32>
    %273 = arith.mulf %267, %32 : vector<2x1xf32>
    %274 = vector.broadcast %273 : vector<2x1xf32> to vector<2x512xf32>
    %275 = vector.broadcast %3 : vector<1x512xf32> to vector<2x512xf32>
    %276 = arith.mulf %274, %275 : vector<2x512xf32>
    %277 = arith.addf %272, %276 : vector<2x512xf32>
    %278 = vector.extract_strided_slice %277 {offsets = [0, 0], sizes = [2, 128], strides = [1, 1]} : vector<2x512xf32> to vector<2x128xf32>
    %cst_69 = arith.constant 5.000000e-01 : f32
    %279 = vector.broadcast %cst_69 : f32 to vector<2x128xf32>
    %280 = arith.mulf %279, %278 : vector<2x128xf32>
    %281 = math.tanh %280 : vector<2x128xf32>
    %cst_70 = arith.constant 1.000000e+00 : f32
    %282 = vector.broadcast %cst_70 : f32 to vector<2x128xf32>
    %283 = arith.addf %281, %282 : vector<2x128xf32>
    %cst_71 = arith.constant 5.000000e-01 : f32
    %284 = vector.broadcast %cst_71 : f32 to vector<2x128xf32>
    %285 = arith.mulf %284, %283 : vector<2x128xf32>
    %286 = vector.extract_strided_slice %277 {offsets = [0, 128], sizes = [2, 128], strides = [1, 1]} : vector<2x512xf32> to vector<2x128xf32>
    %cst_72 = arith.constant 5.000000e-01 : f32
    %287 = vector.broadcast %cst_72 : f32 to vector<2x128xf32>
    %288 = arith.mulf %287, %286 : vector<2x128xf32>
    %289 = math.tanh %288 : vector<2x128xf32>
    %cst_73 = arith.constant 1.000000e+00 : f32
    %290 = vector.broadcast %cst_73 : f32 to vector<2x128xf32>
    %291 = arith.addf %289, %290 : vector<2x128xf32>
    %cst_74 = arith.constant 5.000000e-01 : f32
    %292 = vector.broadcast %cst_74 : f32 to vector<2x128xf32>
    %293 = arith.mulf %292, %291 : vector<2x128xf32>
    %294 = vector.extract_strided_slice %277 {offsets = [0, 256], sizes = [2, 128], strides = [1, 1]} : vector<2x512xf32> to vector<2x128xf32>
    %295 = math.tanh %294 : vector<2x128xf32>
    %296 = vector.extract_strided_slice %277 {offsets = [0, 384], sizes = [2, 128], strides = [1, 1]} : vector<2x512xf32> to vector<2x128xf32>
    %cst_75 = arith.constant 5.000000e-01 : f32
    %297 = vector.broadcast %cst_75 : f32 to vector<2x128xf32>
    %298 = arith.mulf %297, %296 : vector<2x128xf32>
    %299 = math.tanh %298 : vector<2x128xf32>
    %cst_76 = arith.constant 1.000000e+00 : f32
    %300 = vector.broadcast %cst_76 : f32 to vector<2x128xf32>
    %301 = arith.addf %299, %300 : vector<2x128xf32>
    %cst_77 = arith.constant 5.000000e-01 : f32
    %302 = vector.broadcast %cst_77 : f32 to vector<2x128xf32>
    %303 = arith.mulf %302, %301 : vector<2x128xf32>
    %304 = arith.mulf %293, %246 : vector<2x128xf32>
    %305 = arith.mulf %285, %295 : vector<2x128xf32>
    %306 = arith.addf %304, %305 : vector<2x128xf32>
    %307 = math.tanh %306 : vector<2x128xf32>
    %308 = arith.mulf %303, %307 : vector<2x128xf32>
    %309 = vector.extract_strided_slice %308 {offsets = [0, 0], sizes = [2, 40], strides = [1, 1]} : vector<2x128xf32> to vector<2x40xf32>
    %cst_78 = arith.constant dense<0.000000e+00> : vector<2x640xf32>
    %310 = tpu.matmul %309, %1, %cst_78 {dimension_numbers = #tpu.dot_dimension_numbers<[1], [0], [0], [1], [0, 0, 1, 1], [], []>} : vector<2x40xf32>, vector<40x640xf32>, vector<2x640xf32> -> vector<2x640xf32>
    %311 = vector.extract_strided_slice %310 {offsets = [0, 512], sizes = [2, 128], strides = [1, 1]} : vector<2x640xf32> to vector<2x128xf32>
    %312 = vector.broadcast %5 : vector<1x128xf32> to vector<2x128xf32>
    %313 = arith.addf %311, %312 : vector<2x128xf32>
    %314 = vector.extract_strided_slice %313 {offsets = [0, 0], sizes = [2, 1], strides = [1, 1]} : vector<2x128xf32> to vector<2x1xf32>
    %315 = vector.extract_strided_slice %313 {offsets = [0, 1], sizes = [2, 1], strides = [1, 1]} : vector<2x128xf32> to vector<2x1xf32>
    %cst_79 = arith.constant 0.000000e+00 : f32
    %316 = vector.broadcast %cst_79 : f32 to vector<2x1xf32>
    %317 = arith.maximumf %315, %316 : vector<2x1xf32>
    %318 = math.absf %315 : vector<2x1xf32>
    %cst_80 = arith.constant 0.000000e+00 : f32
    %319 = vector.broadcast %cst_80 : f32 to vector<2x1xf32>
    %320 = arith.subf %319, %318 : vector<2x1xf32>
    %321 = math.exp %320 : vector<2x1xf32>
    %cst_81 = arith.constant 1.000000e+00 : f32
    %322 = vector.broadcast %cst_81 : f32 to vector<2x1xf32>
    %323 = arith.addf %322, %321 : vector<2x1xf32>
    %324 = math.log %323 : vector<2x1xf32>
    %325 = arith.addf %317, %324 : vector<2x1xf32>
    %326 = arith.mulf %325, %23 : vector<2x1xf32>
    %327 = arith.addf %314, %326 : vector<2x1xf32>
    %328 = arith.mulf %327, %31 : vector<2x1xf32>
    %329 = arith.mulf %314, %31 : vector<2x1xf32>
    %330 = arith.mulf %325, %31 : vector<2x1xf32>
    %331 = vector.extract_strided_slice %310 {offsets = [0, 0], sizes = [2, 512], strides = [1, 1]} : vector<2x640xf32> to vector<2x512xf32>
    %332 = arith.addf %16, %331 : vector<2x512xf32>
    %333 = arith.mulf %327, %32 : vector<2x1xf32>
    %334 = vector.broadcast %333 : vector<2x1xf32> to vector<2x512xf32>
    %335 = vector.broadcast %3 : vector<1x512xf32> to vector<2x512xf32>
    %336 = arith.mulf %334, %335 : vector<2x512xf32>
    %337 = arith.addf %332, %336 : vector<2x512xf32>
    %338 = vector.extract_strided_slice %337 {offsets = [0, 0], sizes = [2, 128], strides = [1, 1]} : vector<2x512xf32> to vector<2x128xf32>
    %cst_82 = arith.constant 5.000000e-01 : f32
    %339 = vector.broadcast %cst_82 : f32 to vector<2x128xf32>
    %340 = arith.mulf %339, %338 : vector<2x128xf32>
    %341 = math.tanh %340 : vector<2x128xf32>
    %cst_83 = arith.constant 1.000000e+00 : f32
    %342 = vector.broadcast %cst_83 : f32 to vector<2x128xf32>
    %343 = arith.addf %341, %342 : vector<2x128xf32>
    %cst_84 = arith.constant 5.000000e-01 : f32
    %344 = vector.broadcast %cst_84 : f32 to vector<2x128xf32>
    %345 = arith.mulf %344, %343 : vector<2x128xf32>
    %346 = vector.extract_strided_slice %337 {offsets = [0, 128], sizes = [2, 128], strides = [1, 1]} : vector<2x512xf32> to vector<2x128xf32>
    %cst_85 = arith.constant 5.000000e-01 : f32
    %347 = vector.broadcast %cst_85 : f32 to vector<2x128xf32>
    %348 = arith.mulf %347, %346 : vector<2x128xf32>
    %349 = math.tanh %348 : vector<2x128xf32>
    %cst_86 = arith.constant 1.000000e+00 : f32
    %350 = vector.broadcast %cst_86 : f32 to vector<2x128xf32>
    %351 = arith.addf %349, %350 : vector<2x128xf32>
    %cst_87 = arith.constant 5.000000e-01 : f32
    %352 = vector.broadcast %cst_87 : f32 to vector<2x128xf32>
    %353 = arith.mulf %352, %351 : vector<2x128xf32>
    %354 = vector.extract_strided_slice %337 {offsets = [0, 256], sizes = [2, 128], strides = [1, 1]} : vector<2x512xf32> to vector<2x128xf32>
    %355 = math.tanh %354 : vector<2x128xf32>
    %356 = vector.extract_strided_slice %337 {offsets = [0, 384], sizes = [2, 128], strides = [1, 1]} : vector<2x512xf32> to vector<2x128xf32>
    %cst_88 = arith.constant 5.000000e-01 : f32
    %357 = vector.broadcast %cst_88 : f32 to vector<2x128xf32>
    %358 = arith.mulf %357, %356 : vector<2x128xf32>
    %359 = math.tanh %358 : vector<2x128xf32>
    %cst_89 = arith.constant 1.000000e+00 : f32
    %360 = vector.broadcast %cst_89 : f32 to vector<2x128xf32>
    %361 = arith.addf %359, %360 : vector<2x128xf32>
    %cst_90 = arith.constant 5.000000e-01 : f32
    %362 = vector.broadcast %cst_90 : f32 to vector<2x128xf32>
    %363 = arith.mulf %362, %361 : vector<2x128xf32>
    %364 = arith.mulf %353, %306 : vector<2x128xf32>
    %365 = arith.mulf %345, %355 : vector<2x128xf32>
    %366 = arith.addf %364, %365 : vector<2x128xf32>
    %367 = math.tanh %366 : vector<2x128xf32>
    %368 = arith.mulf %363, %367 : vector<2x128xf32>
    %369 = vector.extract_strided_slice %368 {offsets = [0, 0], sizes = [2, 40], strides = [1, 1]} : vector<2x128xf32> to vector<2x40xf32>
    %cst_91 = arith.constant dense<0.000000e+00> : vector<2x640xf32>
    %370 = tpu.matmul %369, %1, %cst_91 {dimension_numbers = #tpu.dot_dimension_numbers<[1], [0], [0], [1], [0, 0, 1, 1], [], []>} : vector<2x40xf32>, vector<40x640xf32>, vector<2x640xf32> -> vector<2x640xf32>
    %371 = vector.extract_strided_slice %370 {offsets = [0, 512], sizes = [2, 128], strides = [1, 1]} : vector<2x640xf32> to vector<2x128xf32>
    %372 = vector.broadcast %5 : vector<1x128xf32> to vector<2x128xf32>
    %373 = arith.addf %371, %372 : vector<2x128xf32>
    %374 = vector.extract_strided_slice %373 {offsets = [0, 0], sizes = [2, 1], strides = [1, 1]} : vector<2x128xf32> to vector<2x1xf32>
    %375 = vector.extract_strided_slice %373 {offsets = [0, 1], sizes = [2, 1], strides = [1, 1]} : vector<2x128xf32> to vector<2x1xf32>
    %cst_92 = arith.constant 0.000000e+00 : f32
    %376 = vector.broadcast %cst_92 : f32 to vector<2x1xf32>
    %377 = arith.maximumf %375, %376 : vector<2x1xf32>
    %378 = math.absf %375 : vector<2x1xf32>
    %cst_93 = arith.constant 0.000000e+00 : f32
    %379 = vector.broadcast %cst_93 : f32 to vector<2x1xf32>
    %380 = arith.subf %379, %378 : vector<2x1xf32>
    %381 = math.exp %380 : vector<2x1xf32>
    %cst_94 = arith.constant 1.000000e+00 : f32
    %382 = vector.broadcast %cst_94 : f32 to vector<2x1xf32>
    %383 = arith.addf %382, %381 : vector<2x1xf32>
    %384 = math.log %383 : vector<2x1xf32>
    %385 = arith.addf %377, %384 : vector<2x1xf32>
    %386 = arith.mulf %385, %24 : vector<2x1xf32>
    %387 = arith.addf %374, %386 : vector<2x1xf32>
    %388 = arith.mulf %387, %31 : vector<2x1xf32>
    %389 = arith.mulf %374, %31 : vector<2x1xf32>
    %390 = arith.mulf %385, %31 : vector<2x1xf32>
    %391 = tpu.concatenate %208, %268, %328, %388, %209, %269, %329, %389, %210, %270, %330, %390 in 1 : vector<2x1xf32>, vector<2x1xf32>, vector<2x1xf32>, vector<2x1xf32>, vector<2x1xf32>, vector<2x1xf32>, vector<2x1xf32>, vector<2x1xf32>, vector<2x1xf32>, vector<2x1xf32>, vector<2x1xf32>, vector<2x1xf32> -> vector<2x12xf32>
    %c0_95 = arith.constant 0 : index
    %c0_96 = arith.constant 0 : index
    %392 = vector.load %arg2[%c0_95, %c0_96] : memref<2x12xf32, #tpu.memory_space<vmem>>, vector<2x12xf32>
    tpu.vector_store %arg2[%c0_95, %c0_96], %391 {strides = array<i32>} : memref<2x12xf32, #tpu.memory_space<vmem>>, vector<2x12xf32>,
    return
  }
}

</mosaic_0001>

<llo_original>
// kernel: deepar_forward.1
$region0: #{deepar_forward.1}
  #allocation0 [shape = 'u32[]', space=smem, size = 0x4, offset = 0x4, fixed_abs, tag = 'smem constant byte address 0x4 - core index']
  #allocation1 [shape = 'u32[144,128]{1,0:T(1,128)}', space=vmem, size = 0x12000, scoped, tag = 'internal scratch']
  %s0 = inlined_call_operand.vmem [shape: f32[16,8], index: 0, kind: input, shape index: {}]
  %s1 = inlined_call_operand.vmem [shape: f32[56,640], index: 1, kind: input, shape index: {}]
  %s2 = inlined_call_operand.vmem [shape: f32[2,12], index: 2, kind: output, shape index: {}]
  %s3 = sld [smem:[#allocation0]]
  $region18: #{deepar_forward.1} parent=0
    _
  %s5 = ssub.s32 1, %s3
  %s6 = scalar_select 0, %s5, %s3
  // Predicated region
  $region2: #{deepar_forward.1} parent=0 // pred_check
    _
  $region3: #{deepar_forward.1} parent=0 // pred_check_branch
    %8 = sbr.rel (0) target = $region5
  $region4: #{deepar_forward.1} parent=0 // pred_region
    _
  $region5: #{deepar_forward.1} parent=0 // pred_fallthru
    _
  // Predicated region
  $region6: #{deepar_forward.1} parent=0 // pred_check
    _
  $region7: #{deepar_forward.1} parent=0 // pred_check_branch
    %10 = sbr.rel (0) target = $region9
  $region8: #{deepar_forward.1} parent=0 // pred_region
    _
  $region9: #{deepar_forward.1} parent=0 // pred_fallthru
    _
  %v11 = vld [vmem:[%s1] sm:$0xff]
  %v12 = vld [vmem:[%s1 + $0x8] sm:$0xff]
  %v13 = vld [vmem:[%s1 + $0x10] sm:$0xff]
  %v14 = vld [vmem:[%s1 + $0x18] sm:$0xff]
  %v15 = vld [vmem:[%s1 + $0x28] sm:$0xff]
  %v16 = vld [vmem:[%s1 + $0x30] sm:$0xff]
  %v17 = vld [vmem:[%s1 + $0x38] sm:$0xff]
  %v18 = vld [vmem:[%s1 + $0x40] sm:$0xff]
  %v19 = vld [vmem:[%s1 + $0x50] sm:$0xff]
  %v20 = vld [vmem:[%s1 + $0x58] sm:$0xff]
  %v21 = vld [vmem:[%s1 + $0x60] sm:$0xff]
  %v22 = vld [vmem:[%s1 + $0x68] sm:$0xff]
  %v23 = vld [vmem:[%s1 + $0x78] sm:$0xff]
  %v24 = vld [vmem:[%s1 + $0x80] sm:$0xff]
  %v25 = vld [vmem:[%s1 + $0x88] sm:$0xff]
  %v26 = vld [vmem:[%s1 + $0x90] sm:$0xff]
  %v27 = vld [vmem:[%s1 + $0xa0] sm:$0xff]
  %v28 = vld [vmem:[%s1 + $0xa8] sm:$0xff]
  %v29 = vld [vmem:[%s1 + $0xb0] sm:$0xff]
  %v30 = vld [vmem:[%s1 + $0xb8] sm:$0xff]
  %v31 = vld [vmem:[%s1 + $0x20] sm:$0xff]
  %v32 = vld [vmem:[%s1 + $0x48] sm:$0xff]
  %v33 = vld [vmem:[%s1 + $0x70] sm:$0xff]
  %v34 = vld [vmem:[%s1 + $0x98] sm:$0xff]
  %v35 = vld [vmem:[%s1 + $0xc0] sm:$0xff]
  %v36 = vld [vmem:[%s1 + $0xc8] sm:$0xff]
  %v37 = vld [vmem:[%s1 + $0xd0] sm:$0xff]
  %v38 = vld [vmem:[%s1 + $0xd8] sm:$0xff]
  %v39 = vld [vmem:[%s1 + $0xe0] sm:$0xff]
  %s40 = scalar_lea.vmem %s1, 240
  %v41 = vld [vmem:[%s40] ss:$8 sm:$0xf]
  %s42 = scalar_lea.vmem %s1, 241
  %v43 = vld [vmem:[%s42] ss:$8 sm:$0xf]
  %v44 = vld [vmem:[%s1 + $0x110] ss:$0 sm:$0xff]
  %v45 = vld [vmem:[%s0] sm:$0xff]
  %v46 = vld [vmem:[%s0 + $0x8] sm:$0xff]
  %v48 = vlaneseq
  %v49 = vshrl.u32 %v48, 7
  %v50 = vsub.s32 0, %v49
  %v51 = vrot.slane %v43, %v50
  %v52 = vlaneseq
  %v53 = vshrl.u32 %v52, 7
  %v54 = vsub.s32 1, %v53
  %v55 = vrot.slane %v43, %v54
  %v56 = vlaneseq
  %v57 = vshrl.u32 %v56, 7
  %v58 = vsub.s32 2, %v57
  %v59 = vrot.slane %v43, %v58
  %v60 = vlaneseq
  %v61 = vshrl.u32 %v60, 7
  %v62 = vsub.s32 3, %v61
  %v63 = vrot.slane %v43, %v62
  %vm68 = vcmask 64512
  %v70 = vsel %vm68, %v45, 0
  %v73 = vsel %vm68, %v46, 0
  %75 = vmatprep.subr.mxu0 %v37
  %76 = vmatpush1.msra.mxu0 %v36
  %77 = vmatprep.subr.mxu0 0.0
  %78 = vmatpush1.msra.mxu0 0.0
  %79 = vmatprep.subr.mxu0 0.0
  %80 = vmatpush1.msra.mxu0 0.0
  %81 = vmatprep.subr.mxu0 0.0
  %82 = vmatpush1.msra.mxu0 0.0
  %83 = vmatprep.subr.mxu0 0.0
  %84 = vmatpush1.msra.mxu0 0.0
  %85 = vmatprep.subr.mxu0 0.0
  %86 = vmatpush1.msra.mxu0 0.0
  %87 = vmatprep.subr.mxu0 0.0
  %88 = vmatpush1.msra.mxu0 0.0
  %89 = vmatprep.subr.mxu0 0.0
  %90 = vmatpush1.msra.mxu0 0.0
  %91 = vmatprep.subr.mxu0 0.0
  %92 = vmatpush1.msra.mxu0 0.0
  %93 = vmatprep.subr.mxu0 0.0
  %94 = vmatpush1.msra.mxu0 0.0
  %95 = vmatprep.subr.mxu0 0.0
  %96 = vmatpush1.msra.mxu0 0.0
  %97 = vmatprep.subr.mxu0 0.0
  %98 = vmatpush1.msra.mxu0 0.0
  %99 = vmatprep.subr.mxu0 0.0
  %100 = vmatpush1.msra.mxu0 0.0
  %101 = vmatprep.subr.mxu0 0.0
  %102 = vmatpush1.msra.mxu0 0.0
  %103 = vmatprep.subr.mxu0 0.0
  %104 = vmatpush1.msra.mxu0 0.0
  %105 = vmatprep.subr.mxu0 0.0
  %106 = vmatpush1.msra.mxu0 0.0
  %107 = vmatprep.subr.mxu0 0.0
  %108 = vmatpush1.msra.mxu0 0.0
  %109 = vmatprep.subr.mxu0 0.0
  %110 = vmatpush1.msra.mxu0 0.0
  %111 = vmatprep.subr.mxu0 0.0
  %112 = vmatpush1.msra.mxu0 0.0
  %113 = vmatprep.subr.mxu0 0.0
  %114 = vmatpush1.msra.mxu0 0.0
  %115 = vmatprep.subr.mxu0 0.0
  %116 = vmatpush1.msra.mxu0 0.0
  %117 = vmatprep.subr.mxu0 0.0
  %118 = vmatpush1.msra.mxu0 0.0
  %119 = vmatprep.subr.mxu0 0.0
  %120 = vmatpush1.msra.mxu0 0.0
  %121 = vmatprep.subr.mxu0 0.0
  %122 = vmatpush1.msra.mxu0 0.0
  %123 = vmatprep.subr.mxu0 0.0
  %124 = vmatpush1.msra.mxu0 0.0
  %125 = vmatprep.subr.mxu0 0.0
  %126 = vmatpush1.msra.mxu0 0.0
  %127 = vmatprep.subr.mxu0 0.0
  %128 = vmatpush1.msra.mxu0 0.0
  %129 = vmatprep.subr.mxu0 0.0
  %130 = vmatpush1.msra.mxu0 0.0
  %131 = vmatprep.subr.mxu0 0.0
  %132 = vmatpush1.msra.mxu0 0.0
  %133 = vmatprep.subr.mxu0 0.0
  %134 = vmatpush1.msra.mxu0 0.0
  %135 = vmatprep.subr.mxu0 0.0
  %136 = vmatpush1.msra.mxu0 0.0
  %137 = vmatprep.subr.mxu0 0.0
  %138 = vmatpush1.msra.mxu0 0.0
  %139 = vmatprep.mubr.f32.mxu0 0.0
  %140 = vmatmul.mubr.f32.gmra.mrb[0].mxu0 %v70
  %v141 = vpop.f32.mrb[0].mxu0
  %v142 = vadd.f32 %v51, %v141
  %v143 = vpop.f32.mrb[0].mxu0
  %v144 = vadd.f32 %v55, %v143
  %145 = vmatprep.mubr.f32.mxu0 0.0
  %146 = vmatmul.mubr.f32.gmra.mrb[0].mxu0 %v73
  %v147 = vpop.f32.mrb[0].mxu0
  %v148 = vadd.f32 %v51, %v147
  %v149 = vpop.f32.mrb[0].mxu0
  %v150 = vadd.f32 %v55, %v149
  %151 = vdwg.mxu0
  %152 = vmatprep.subr.mxu0 %v39
  %153 = vmatpush1.msra.mxu0 %v38
  %154 = vmatprep.subr.mxu0 0.0
  %155 = vmatpush1.msra.mxu0 0.0
  %156 = vmatprep.subr.mxu0 0.0
  %157 = vmatpush1.msra.mxu0 0.0
  %158 = vmatprep.subr.mxu0 0.0
  %159 = vmatpush1.msra.mxu0 0.0
  %160 = vmatprep.subr.mxu0 0.0
  %161 = vmatpush1.msra.mxu0 0.0
  %162 = vmatprep.subr.mxu0 0.0
  %163 = vmatpush1.msra.mxu0 0.0
  %164 = vmatprep.subr.mxu0 0.0
  %165 = vmatpush1.msra.mxu0 0.0
  %166 = vmatprep.subr.mxu0 0.0
  %167 = vmatpush1.msra.mxu0 0.0
  %168 = vmatprep.subr.mxu0 0.0
  %169 = vmatpush1.msra.mxu0 0.0
  %170 = vmatprep.subr.mxu0 0.0
  %171 = vmatpush1.msra.mxu0 0.0
  %172 = vmatprep.subr.mxu0 0.0
  %173 = vmatpush1.msra.mxu0 0.0
  %174 = vmatprep.subr.mxu0 0.0
  %175 = vmatpush1.msra.mxu0 0.0
  %176 = vmatprep.subr.mxu0 0.0
  %177 = vmatpush1.msra.mxu0 0.0
  %178 = vmatprep.subr.mxu0 0.0
  %179 = vmatpush1.msra.mxu0 0.0
  %180 = vmatprep.subr.mxu0 0.0
  %181 = vmatpush1.msra.mxu0 0.0
  %182 = vmatprep.subr.mxu0 0.0
  %183 = vmatpush1.msra.mxu0 0.0
  %184 = vmatprep.subr.mxu0 0.0
  %185 = vmatpush1.msra.mxu0 0.0
  %186 = vmatprep.subr.mxu0 0.0
  %187 = vmatpush1.msra.mxu0 0.0
  %188 = vmatprep.subr.mxu0 0.0
  %189 = vmatpush1.msra.mxu0 0.0
  %190 = vmatprep.subr.mxu0 0.0
  %191 = vmatpush1.msra.mxu0 0.0
  %192 = vmatprep.subr.mxu0 0.0
  %193 = vmatpush1.msra.mxu0 0.0
  %194 = vmatprep.subr.mxu0 0.0
  %195 = vmatpush1.msra.mxu0 0.0
  %196 = vmatprep.subr.mxu0 0.0
  %197 = vmatpush1.msra.mxu0 0.0
  %198 = vmatprep.subr.mxu0 0.0
  %199 = vmatpush1.msra.mxu0 0.0
  %200 = vmatprep.subr.mxu0 0.0
  %201 = vmatpush1.msra.mxu0 0.0
  %202 = vmatprep.subr.mxu0 0.0
  %203 = vmatpush1.msra.mxu0 0.0
  %204 = vmatprep.subr.mxu0 0.0
  %205 = vmatpush1.msra.mxu0 0.0
  %206 = vmatprep.subr.mxu0 0.0
  %207 = vmatpush1.msra.mxu0 0.0
  %208 = vmatprep.subr.mxu0 0.0
  %209 = vmatpush1.msra.mxu0 0.0
  %210 = vmatprep.subr.mxu0 0.0
  %211 = vmatpush1.msra.mxu0 0.0
  %212 = vmatprep.subr.mxu0 0.0
  %213 = vmatpush1.msra.mxu0 0.0
  %214 = vmatprep.subr.mxu0 0.0
  %215 = vmatpush1.msra.mxu0 0.0
  %216 = vmatprep.mubr.f32.mxu0 0.0
  %217 = vmatmul.mubr.f32.gmra.mrb[0].mxu0 %v70
  %v218 = vpop.f32.mrb[0].mxu0
  %v219 = vadd.f32 %v59, %v218
  %v220 = vpop.f32.mrb[0].mxu0
  %v221 = vadd.f32 %v63, %v220
  %222 = vmatprep.mubr.f32.mxu0 0.0
  %223 = vmatmul.mubr.f32.gmra.mrb[0].mxu0 %v73
  %v224 = vpop.f32.mrb[0].mxu0
  %v225 = vadd.f32 %v59, %v224
  %v226 = vpop.f32.mrb[0].mxu0
  %v227 = vadd.f32 %v63, %v226
  %228 = vdwg.mxu0
  %v229 = vrot.slane %v45, 2
  %v231 = vadd.f32 %v45, %v229
  %v232 = vrot.slane %v45, 4
  %v234 = vadd.f32 %v231, %v232
  %v235 = vrot.slane %v45, 6
  %v237 = vadd.f32 %v234, %v235
  %v238 = vmul.f32 %v237, 0.25
  %v239 = vadd.f32 %v238, 1.0
  %v240 = vrcp.pop %v239
  %v241 = vadd.f32 %v142, 0.0
  %v242 = vadd.f32 %v144, 0.0
  %v243 = vadd.f32 %v219, 0.0
  %v244 = vadd.f32 %v221, 0.0
  %v245 = vmul.f32 %v45, %v240
  %247 = vset.pattern.permute.xlu0 0
  %248 = vperm.xlu0 %247, %v245
  %v249 = vpop.permute.xlu0 %248
  %v252 = vlaneseq
  %v253 = vshrl.u32 %v252, 7
  %v254 = vsub.s32 0, %v253
  %v255 = vrot.slane %v41, %v254
  %v256 = vlaneseq
  %v257 = vshrl.u32 %v256, 7
  %v258 = vsub.s32 1, %v257
  %v259 = vrot.slane %v41, %v258
  %v260 = vlaneseq
  %v261 = vshrl.u32 %v260, 7
  %v262 = vsub.s32 2, %v261
  %v263 = vrot.slane %v41, %v262
  %v264 = vlaneseq
  %v265 = vshrl.u32 %v264, 7
  %v266 = vsub.s32 3, %v265
  %v267 = vrot.slane %v41, %v266
  %v272 = vmul.f32 %v249, %v255
  %v273 = vmul.f32 %v249, %v259
  %v274 = vmul.f32 %v249, %v263
  %v275 = vmul.f32 %v249, %v267
  %v280 = vrot.slane %v272, 6
  %v281 = vrot.slane %v273, 6
  %v282 = vrot.slane %v274, 6
  %v283 = vrot.slane %v275, 6
  %v288 = vadd.f32 %v241, %v280
  %v289 = vadd.f32 %v242, %v281
  %v290 = vadd.f32 %v243, %v282
  %v291 = vadd.f32 %v244, %v283
  %v292 = vmul.f32 %v288, 0.5
  %v293 = vtanh.pop %v292
  %v294 = vadd.f32 %v293, 1.0
  %v295 = vmul.f32 %v294, 0.5
  %v296 = vmul.f32 %v289, 0.5
  %v297 = vtanh.pop %v296
  %v298 = vadd.f32 %v297, 1.0
  %v299 = vmul.f32 %v298, 0.5
  %v300 = vtanh.pop %v290
  %v301 = vmul.f32 %v291, 0.5
  %v302 = vtanh.pop %v301
  %v303 = vadd.f32 %v302, 1.0
  %v304 = vmul.f32 %v303, 0.5
  %v305 = vmul.f32 %v299, 0.0
  %v306 = vmul.f32 %v295, %v300
  %v307 = vadd.f32 %v305, %v306
  %v308 = vtanh.pop %v307
  %v309 = vmul.f32 %v304, %v308
  %v311 = vrot.slane %v309, 2
  %vm312 = vcmask 326656
  %v313 = vsel %vm312, %v311, 0
  %315 = vmatprep.subr.mxu0 %v12
  %316 = vmatpush1.msra.mxu0 %v11
  %317 = vmatprep.subr.mxu0 %v16
  %318 = vmatpush1.msra.mxu0 %v15
  %319 = vmatprep.subr.mxu0 %v20
  %320 = vmatpush1.msra.mxu0 %v19
  %321 = vmatprep.subr.mxu0 %v24
  %322 = vmatpush1.msra.mxu0 %v23
  %323 = vmatprep.subr.mxu0 %v28
  %324 = vmatpush1.msra.mxu0 %v27
  %325 = vmatprep.subr.mxu0 0.0
  %326 = vmatpush1.msra.mxu0 0.0
  %327 = vmatprep.subr.mxu0 0.0
  %328 = vmatpush1.msra.mxu0 0.0
  %329 = vmatprep.subr.mxu0 0.0
  %330 = vmatpush1.msra.mxu0 0.0
  %331 = vmatprep.subr.mxu0 0.0
  %332 = vmatpush1.msra.mxu0 0.0
  %333 = vmatprep.subr.mxu0 0.0
  %334 = vmatpush1.msra.mxu0 0.0
  %335 = vmatprep.subr.mxu0 0.0
  %336 = vmatpush1.msra.mxu0 0.0
  %337 = vmatprep.subr.mxu0 0.0
  %338 = vmatpush1.msra.mxu0 0.0
  %339 = vmatprep.subr.mxu0 0.0
  %340 = vmatpush1.msra.mxu0 0.0
  %341 = vmatprep.subr.mxu0 0.0
  %342 = vmatpush1.msra.mxu0 0.0
  %343 = vmatprep.subr.mxu0 0.0
  %344 = vmatpush1.msra.mxu0 0.0
  %345 = vmatprep.subr.mxu0 0.0
  %346 = vmatpush1.msra.mxu0 0.0
  %347 = vmatprep.subr.mxu0 0.0
  %348 = vmatpush1.msra.mxu0 0.0
  %349 = vmatprep.subr.mxu0 0.0
  %350 = vmatpush1.msra.mxu0 0.0
  %351 = vmatprep.subr.mxu0 0.0
  %352 = vmatpush1.msra.mxu0 0.0
  %353 = vmatprep.subr.mxu0 0.0
  %354 = vmatpush1.msra.mxu0 0.0
  %355 = vmatprep.subr.mxu0 0.0
  %356 = vmatpush1.msra.mxu0 0.0
  %357 = vmatprep.subr.mxu0 0.0
  %358 = vmatpush1.msra.mxu0 0.0
  %359 = vmatprep.subr.mxu0 0.0
  %360 = vmatpush1.msra.mxu0 0.0
  %361 = vmatprep.subr.mxu0 0.0
  %362 = vmatpush1.msra.mxu0 0.0
  %363 = vmatprep.subr.mxu0 0.0
  %364 = vmatpush1.msra.mxu0 0.0
  %365 = vmatprep.subr.mxu0 0.0
  %366 = vmatpush1.msra.mxu0 0.0
  %367 = vmatprep.subr.mxu0 0.0
  %368 = vmatpush1.msra.mxu0 0.0
  %369 = vmatprep.subr.mxu0 0.0
  %370 = vmatpush1.msra.mxu0 0.0
  %371 = vmatprep.subr.mxu0 0.0
  %372 = vmatpush1.msra.mxu0 0.0
  %373 = vmatprep.subr.mxu0 0.0
  %374 = vmatpush1.msra.mxu0 0.0
  %375 = vmatprep.subr.mxu0 0.0
  %376 = vmatpush1.msra.mxu0 0.0
  %377 = vmatprep.subr.mxu0 0.0
  %378 = vmatpush1.msra.mxu0 0.0
  %379 = vmatprep.mubr.f32.mxu0 0.0
  %380 = vmatmul.mubr.f32.gmra.mrb[0].mxu0 %v313
  %v381 = vpop.f32.mrb[0].mxu0
  %v382 = vadd.f32 0.0, %v381
  %v383 = vpop.f32.mrb[0].mxu0
  %v384 = vadd.f32 0.0, %v383
  %385 = vdwg.mxu0
  %386 = vmatprep.subr.mxu0 %v14
  %387 = vmatpush1.msra.mxu0 %v13
  %388 = vmatprep.subr.mxu0 %v18
  %389 = vmatpush1.msra.mxu0 %v17
  %390 = vmatprep.subr.mxu0 %v22
  %391 = vmatpush1.msra.mxu0 %v21
  %392 = vmatprep.subr.mxu0 %v26
  %393 = vmatpush1.msra.mxu0 %v25
  %394 = vmatprep.subr.mxu0 %v30
  %395 = vmatpush1.msra.mxu0 %v29
  %396 = vmatprep.subr.mxu0 0.0
  %397 = vmatpush1.msra.mxu0 0.0
  %398 = vmatprep.subr.mxu0 0.0
  %399 = vmatpush1.msra.mxu0 0.0
  %400 = vmatprep.subr.mxu0 0.0
  %401 = vmatpush1.msra.mxu0 0.0
  %402 = vmatprep.subr.mxu0 0.0
  %403 = vmatpush1.msra.mxu0 0.0
  %404 = vmatprep.subr.mxu0 0.0
  %405 = vmatpush1.msra.mxu0 0.0
  %406 = vmatprep.subr.mxu0 0.0
  %407 = vmatpush1.msra.mxu0 0.0
  %408 = vmatprep.subr.mxu0 0.0
  %409 = vmatpush1.msra.mxu0 0.0
  %410 = vmatprep.subr.mxu0 0.0
  %411 = vmatpush1.msra.mxu0 0.0
  %412 = vmatprep.subr.mxu0 0.0
  %413 = vmatpush1.msra.mxu0 0.0
  %414 = vmatprep.subr.mxu0 0.0
  %415 = vmatpush1.msra.mxu0 0.0
  %416 = vmatprep.subr.mxu0 0.0
  %417 = vmatpush1.msra.mxu0 0.0
  %418 = vmatprep.subr.mxu0 0.0
  %419 = vmatpush1.msra.mxu0 0.0
  %420 = vmatprep.subr.mxu0 0.0
  %421 = vmatpush1.msra.mxu0 0.0
  %422 = vmatprep.subr.mxu0 0.0
  %423 = vmatpush1.msra.mxu0 0.0
  %424 = vmatprep.subr.mxu0 0.0
  %425 = vmatpush1.msra.mxu0 0.0
  %426 = vmatprep.subr.mxu0 0.0
  %427 = vmatpush1.msra.mxu0 0.0
  %428 = vmatprep.subr.mxu0 0.0
  %429 = vmatpush1.msra.mxu0 0.0
  %430 = vmatprep.subr.mxu0 0.0
  %431 = vmatpush1.msra.mxu0 0.0
  %432 = vmatprep.subr.mxu0 0.0
  %433 = vmatpush1.msra.mxu0 0.0
  %434 = vmatprep.subr.mxu0 0.0
  %435 = vmatpush1.msra.mxu0 0.0
  %436 = vmatprep.subr.mxu0 0.0
  %437 = vmatpush1.msra.mxu0 0.0
  %438 = vmatprep.subr.mxu0 0.0
  %439 = vmatpush1.msra.mxu0 0.0
  %440 = vmatprep.subr.mxu0 0.0
  %441 = vmatpush1.msra.mxu0 0.0
  %442 = vmatprep.subr.mxu0 0.0
  %443 = vmatpush1.msra.mxu0 0.0
  %444 = vmatprep.subr.mxu0 0.0
  %445 = vmatpush1.msra.mxu0 0.0
  %446 = vmatprep.subr.mxu0 0.0
  %447 = vmatpush1.msra.mxu0 0.0
  %448 = vmatprep.subr.mxu0 0.0
  %449 = vmatpush1.msra.mxu0 0.0
  %450 = vmatprep.mubr.f32.mxu0 0.0
  %451 = vmatmul.mubr.f32.gmra.mrb[0].mxu0 %v313
  %v452 = vpop.f32.mrb[0].mxu0
  %v453 = vadd.f32 0.0, %v452
  %v454 = vpop.f32.mrb[0].mxu0
  %v455 = vadd.f32 0.0, %v454
  %456 = vdwg.mxu0
  %v461 = vrot.slane %v382, 4
  %v462 = vrot.slane %v384, 4
  %v463 = vrot.slane %v453, 4
  %v464 = vrot.slane %v455, 4
  %v469 = vadd.f32 %v142, %v461
  %v470 = vadd.f32 %v144, %v462
  %v471 = vadd.f32 %v219, %v463
  %v472 = vadd.f32 %v221, %v464
  %v474 = vrot.slane %v240, 6
  %v476 = vmul.f32 %v45, %v474
  %478 = vset.pattern.permute.xlu0 0
  %479 = vperm.xlu0 %478, %v476
  %v480 = vpop.permute.xlu0 %479
  %v482 = vmul.f32 %v480, %v255
  %v483 = vmul.f32 %v480, %v259
  %v484 = vmul.f32 %v480, %v263
  %v485 = vmul.f32 %v480, %v267
  %v490 = vrot.slane %v482, 6
  %v491 = vrot.slane %v483, 6
  %v492 = vrot.slane %v484, 6
  %v493 = vrot.slane %v485, 6
  %v498 = vadd.f32 %v469, %v490
  %v499 = vadd.f32 %v470, %v491
  %v500 = vadd.f32 %v471, %v492
  %v501 = vadd.f32 %v472, %v493
  %v502 = vmul.f32 %v498, 0.5
  %v503 = vtanh.pop %v502
  %v504 = vadd.f32 %v503, 1.0
  %v505 = vmul.f32 %v504, 0.5
  %v506 = vmul.f32 %v499, 0.5
  %v507 = vtanh.pop %v506
  %v508 = vadd.f32 %v507, 1.0
  %v509 = vmul.f32 %v508, 0.5
  %v510 = vtanh.pop %v500
  %v511 = vmul.f32 %v501, 0.5
  %v512 = vtanh.pop %v511
  %v513 = vadd.f32 %v512, 1.0
  %v514 = vmul.f32 %v513, 0.5
  %v516 = vrot.slane %v307, 6
  %v518 = vmul.f32 %v509, %v516
  %v519 = vmul.f32 %v505, %v510
  %v520 = vadd.f32 %v518, %v519
  %v521 = vtanh.pop %v520
  %v522 = vmul.f32 %v514, %v521
  %v524 = vrot.slane %v522, 4
  %v525 = vsel %vm312, %v524, 0
  %527 = vmatprep.subr.mxu0 %v12
  %528 = vmatpush1.msra.mxu0 %v11
  %529 = vmatprep.subr.mxu0 %v16
  %530 = vmatpush1.msra.mxu0 %v15
  %531 = vmatprep.subr.mxu0 %v20
  %532 = vmatpush1.msra.mxu0 %v19
  %533 = vmatprep.subr.mxu0 %v24
  %534 = vmatpush1.msra.mxu0 %v23
  %535 = vmatprep.subr.mxu0 %v28
  %536 = vmatpush1.msra.mxu0 %v27
  %537 = vmatprep.subr.mxu0 0.0
  %538 = vmatpush1.msra.mxu0 0.0
  %539 = vmatprep.subr.mxu0 0.0
  %540 = vmatpush1.msra.mxu0 0.0
  %541 = vmatprep.subr.mxu0 0.0
  %542 = vmatpush1.msra.mxu0 0.0
  %543 = vmatprep.subr.mxu0 0.0
  %544 = vmatpush1.msra.mxu0 0.0
  %545 = vmatprep.subr.mxu0 0.0
  %546 = vmatpush1.msra.mxu0 0.0
  %547 = vmatprep.subr.mxu0 0.0
  %548 = vmatpush1.msra.mxu0 0.0
  %549 = vmatprep.subr.mxu0 0.0
  %550 = vmatpush1.msra.mxu0 0.0
  %551 = vmatprep.subr.mxu0 0.0
  %552 = vmatpush1.msra.mxu0 0.0
  %553 = vmatprep.subr.mxu0 0.0
  %554 = vmatpush1.msra.mxu0 0.0
  %555 = vmatprep.subr.mxu0 0.0
  %556 = vmatpush1.msra.mxu0 0.0
  %557 = vmatprep.subr.mxu0 0.0
  %558 = vmatpush1.msra.mxu0 0.0
  %559 = vmatprep.subr.mxu0 0.0
  %560 = vmatpush1.msra.mxu0 0.0
  %561 = vmatprep.subr.mxu0 0.0
  %562 = vmatpush1.msra.mxu0 0.0
  %563 = vmatprep.subr.mxu0 0.0
  %564 = vmatpush1.msra.mxu0 0.0
  %565 = vmatprep.subr.mxu0 0.0
  %566 = vmatpush1.msra.mxu0 0.0
  %567 = vmatprep.subr.mxu0 0.0
  %568 = vmatpush1.msra.mxu0 0.0
  %569 = vmatprep.subr.mxu0 0.0
  %570 = vmatpush1.msra.mxu0 0.0
  %571 = vmatprep.subr.mxu0 0.0
  %572 = vmatpush1.msra.mxu0 0.0
  %573 = vmatprep.subr.mxu0 0.0
  %574 = vmatpush1.msra.mxu0 0.0
  %575 = vmatprep.subr.mxu0 0.0
  %576 = vmatpush1.msra.mxu0 0.0
  %577 = vmatprep.subr.mxu0 0.0
  %578 = vmatpush1.msra.mxu0 0.0
  %579 = vmatprep.subr.mxu0 0.0
  %580 = vmatpush1.msra.mxu0 0.0
  %581 = vmatprep.subr.mxu0 0.0
  %582 = vmatpush1.msra.mxu0 0.0
  %583 = vmatprep.subr.mxu0 0.0
  %584 = vmatpush1.msra.mxu0 0.0
  %585 = vmatprep.subr.mxu0 0.0
  %586 = vmatpush1.msra.mxu0 0.0
  %587 = vmatprep.subr.mxu0 0.0
  %588 = vmatpush1.msra.mxu0 0.0
  %589 = vmatprep.subr.mxu0 0.0
  %590 = vmatpush1.msra.mxu0 0.0
  %591 = vmatprep.mubr.f32.mxu0 0.0
  %592 = vmatmul.mubr.f32.gmra.mrb[0].mxu0 %v525
  %v593 = vpop.f32.mrb[0].mxu0
  %v594 = vadd.f32 0.0, %v593
  %v595 = vpop.f32.mrb[0].mxu0
  %v596 = vadd.f32 0.0, %v595
  %597 = vdwg.mxu0
  %598 = vmatprep.subr.mxu0 %v14
  %599 = vmatpush1.msra.mxu0 %v13
  %600 = vmatprep.subr.mxu0 %v18
  %601 = vmatpush1.msra.mxu0 %v17
  %602 = vmatprep.subr.mxu0 %v22
  %603 = vmatpush1.msra.mxu0 %v21
  %604 = vmatprep.subr.mxu0 %v26
  %605 = vmatpush1.msra.mxu0 %v25
  %606 = vmatprep.subr.mxu0 %v30
  %607 = vmatpush1.msra.mxu0 %v29
  %608 = vmatprep.subr.mxu0 0.0
  %609 = vmatpush1.msra.mxu0 0.0
  %610 = vmatprep.subr.mxu0 0.0
  %611 = vmatpush1.msra.mxu0 0.0
  %612 = vmatprep.subr.mxu0 0.0
  %613 = vmatpush1.msra.mxu0 0.0
  %614 = vmatprep.subr.mxu0 0.0
  %615 = vmatpush1.msra.mxu0 0.0
  %616 = vmatprep.subr.mxu0 0.0
  %617 = vmatpush1.msra.mxu0 0.0
  %618 = vmatprep.subr.mxu0 0.0
  %619 = vmatpush1.msra.mxu0 0.0
  %620 = vmatprep.subr.mxu0 0.0
  %621 = vmatpush1.msra.mxu0 0.0
  %622 = vmatprep.subr.mxu0 0.0
  %623 = vmatpush1.msra.mxu0 0.0
  %624 = vmatprep.subr.mxu0 0.0
  %625 = vmatpush1.msra.mxu0 0.0
  %626 = vmatprep.subr.mxu0 0.0
  %627 = vmatpush1.msra.mxu0 0.0
  %628 = vmatprep.subr.mxu0 0.0
  %629 = vmatpush1.msra.mxu0 0.0
  %630 = vmatprep.subr.mxu0 0.0
  %631 = vmatpush1.msra.mxu0 0.0
  %632 = vmatprep.subr.mxu0 0.0
  %633 = vmatpush1.msra.mxu0 0.0
  %634 = vmatprep.subr.mxu0 0.0
  %635 = vmatpush1.msra.mxu0 0.0
  %636 = vmatprep.subr.mxu0 0.0
  %637 = vmatpush1.msra.mxu0 0.0
  %638 = vmatprep.subr.mxu0 0.0
  %639 = vmatpush1.msra.mxu0 0.0
  %640 = vmatprep.subr.mxu0 0.0
  %641 = vmatpush1.msra.mxu0 0.0
  %642 = vmatprep.subr.mxu0 0.0
  %643 = vmatpush1.msra.mxu0 0.0
  %644 = vmatprep.subr.mxu0 0.0
  %645 = vmatpush1.msra.mxu0 0.0
  %646 = vmatprep.subr.mxu0 0.0
  %647 = vmatpush1.msra.mxu0 0.0
  %648 = vmatprep.subr.mxu0 0.0
  %649 = vmatpush1.msra.mxu0 0.0
  %650 = vmatprep.subr.mxu0 0.0
  %651 = vmatpush1.msra.mxu0 0.0
  %652 = vmatprep.subr.mxu0 0.0
  %653 = vmatpush1.msra.mxu0 0.0
  %654 = vmatprep.subr.mxu0 0.0
  %655 = vmatpush1.msra.mxu0 0.0
  %656 = vmatprep.subr.mxu0 0.0
  %657 = vmatpush1.msra.mxu0 0.0
  %658 = vmatprep.subr.mxu0 0.0
  %659 = vmatpush1.msra.mxu0 0.0
  %660 = vmatprep.subr.mxu0 0.0
  %661 = vmatpush1.msra.mxu0 0.0
  %662 = vmatprep.mubr.f32.mxu0 0.0
  %663 = vmatmul.mubr.f32.gmra.mrb[0].mxu0 %v525
  %v664 = vpop.f32.mrb[0].mxu0
  %v665 = vadd.f32 0.0, %v664
  %v666 = vpop.f32.mrb[0].mxu0
  %v667 = vadd.f32 0.0, %v666
  %668 = vdwg.mxu0
  %v673 = vrot.slane %v594, 2
  %v674 = vrot.slane %v596, 2
  %v675 = vrot.slane %v665, 2
  %v676 = vrot.slane %v667, 2
  %v681 = vadd.f32 %v142, %v673
  %v682 = vadd.f32 %v144, %v674
  %v683 = vadd.f32 %v219, %v675
  %v684 = vadd.f32 %v221, %v676
  %v685 = vrot.slane %v240, 4
  %v687 = vmul.f32 %v45, %v685
  %689 = vset.pattern.permute.xlu0 0
  %690 = vperm.xlu0 %689, %v687
  %v691 = vpop.permute.xlu0 %690
  %v693 = vmul.f32 %v691, %v255
  %v694 = vmul.f32 %v691, %v259
  %v695 = vmul.f32 %v691, %v263
  %v696 = vmul.f32 %v691, %v267
  %v701 = vrot.slane %v693, 6
  %v702 = vrot.slane %v694, 6
  %v703 = vrot.slane %v695, 6
  %v704 = vrot.slane %v696, 6
  %v709 = vadd.f32 %v681, %v701
  %v710 = vadd.f32 %v682, %v702
  %v711 = vadd.f32 %v683, %v703
  %v712 = vadd.f32 %v684, %v704
  %v713 = vmul.f32 %v709, 0.5
  %v714 = vtanh.pop %v713
  %v715 = vadd.f32 %v714, 1.0
  %v716 = vmul.f32 %v715, 0.5
  %v717 = vmul.f32 %v710, 0.5
  %v718 = vtanh.pop %v717
  %v719 = vadd.f32 %v718, 1.0
  %v720 = vmul.f32 %v719, 0.5
  %v721 = vtanh.pop %v711
  %v722 = vmul.f32 %v712, 0.5
  %v723 = vtanh.pop %v722
  %v724 = vadd.f32 %v723, 1.0
  %v725 = vmul.f32 %v724, 0.5
  %v727 = vrot.slane %v520, 6
  %v729 = vmul.f32 %v720, %v727
  %v730 = vmul.f32 %v716, %v721
  %v731 = vadd.f32 %v729, %v730
  %v732 = vtanh.pop %v731
  %v733 = vmul.f32 %v725, %v732
  %v735 = vrot.slane %v733, 6
  %v736 = vsel %vm312, %v735, 0
  %738 = vmatprep.subr.mxu0 %v12
  %739 = vmatpush1.msra.mxu0 %v11
  %740 = vmatprep.subr.mxu0 %v16
  %741 = vmatpush1.msra.mxu0 %v15
  %742 = vmatprep.subr.mxu0 %v20
  %743 = vmatpush1.msra.mxu0 %v19
  %744 = vmatprep.subr.mxu0 %v24
  %745 = vmatpush1.msra.mxu0 %v23
  %746 = vmatprep.subr.mxu0 %v28
  %747 = vmatpush1.msra.mxu0 %v27
  %748 = vmatprep.subr.mxu0 0.0
  %749 = vmatpush1.msra.mxu0 0.0
  %750 = vmatprep.subr.mxu0 0.0
  %751 = vmatpush1.msra.mxu0 0.0
  %752 = vmatprep.subr.mxu0 0.0
  %753 = vmatpush1.msra.mxu0 0.0
  %754 = vmatprep.subr.mxu0 0.0
  %755 = vmatpush1.msra.mxu0 0.0
  %756 = vmatprep.subr.mxu0 0.0
  %757 = vmatpush1.msra.mxu0 0.0
  %758 = vmatprep.subr.mxu0 0.0
  %759 = vmatpush1.msra.mxu0 0.0
  %760 = vmatprep.subr.mxu0 0.0
  %761 = vmatpush1.msra.mxu0 0.0
  %762 = vmatprep.subr.mxu0 0.0
  %763 = vmatpush1.msra.mxu0 0.0
  %764 = vmatprep.subr.mxu0 0.0
  %765 = vmatpush1.msra.mxu0 0.0
  %766 = vmatprep.subr.mxu0 0.0
  %767 = vmatpush1.msra.mxu0 0.0
  %768 = vmatprep.subr.mxu0 0.0
  %769 = vmatpush1.msra.mxu0 0.0
  %770 = vmatprep.subr.mxu0 0.0
  %771 = vmatpush1.msra.mxu0 0.0
  %772 = vmatprep.subr.mxu0 0.0
  %773 = vmatpush1.msra.mxu0 0.0
  %774 = vmatprep.subr.mxu0 0.0
  %775 = vmatpush1.msra.mxu0 0.0
  %776 = vmatprep.subr.mxu0 0.0
  %777 = vmatpush1.msra.mxu0 0.0
  %778 = vmatprep.subr.mxu0 0.0
  %779 = vmatpush1.msra.mxu0 0.0
  %780 = vmatprep.subr.mxu0 0.0
  %781 = vmatpush1.msra.mxu0 0.0
  %782 = vmatprep.subr.mxu0 0.0
  %783 = vmatpush1.msra.mxu0 0.0
  %784 = vmatprep.subr.mxu0 0.0
  %785 = vmatpush1.msra.mxu0 0.0
  %786 = vmatprep.subr.mxu0 0.0
  %787 = vmatpush1.msra.mxu0 0.0
  %788 = vmatprep.subr.mxu0 0.0
  %789 = vmatpush1.msra.mxu0 0.0
  %790 = vmatprep.subr.mxu0 0.0
  %791 = vmatpush1.msra.mxu0 0.0
  %792 = vmatprep.subr.mxu0 0.0
  %793 = vmatpush1.msra.mxu0 0.0
  %794 = vmatprep.subr.mxu0 0.0
  %795 = vmatpush1.msra.mxu0 0.0
  %796 = vmatprep.subr.mxu0 0.0
  %797 = vmatpush1.msra.mxu0 0.0
  %798 = vmatprep.subr.mxu0 0.0
  %799 = vmatpush1.msra.mxu0 0.0
  %800 = vmatprep.subr.mxu0 0.0
  %801 = vmatpush1.msra.mxu0 0.0
  %802 = vmatprep.mubr.f32.mxu0 0.0
  %803 = vmatmul.mubr.f32.gmra.mrb[0].mxu0 %v736
  %v804 = vpop.f32.mrb[0].mxu0
  %v805 = vadd.f32 0.0, %v804
  %v806 = vpop.f32.mrb[0].mxu0
  %v807 = vadd.f32 0.0, %v806
  %808 = vdwg.mxu0
  %809 = vmatprep.subr.mxu0 %v14
  %810 = vmatpush1.msra.mxu0 %v13
  %811 = vmatprep.subr.mxu0 %v18
  %812 = vmatpush1.msra.mxu0 %v17
  %813 = vmatprep.subr.mxu0 %v22
  %814 = vmatpush1.msra.mxu0 %v21
  %815 = vmatprep.subr.mxu0 %v26
  %816 = vmatpush1.msra.mxu0 %v25
  %817 = vmatprep.subr.mxu0 %v30
  %818 = vmatpush1.msra.mxu0 %v29
  %819 = vmatprep.subr.mxu0 0.0
  %820 = vmatpush1.msra.mxu0 0.0
  %821 = vmatprep.subr.mxu0 0.0
  %822 = vmatpush1.msra.mxu0 0.0
  %823 = vmatprep.subr.mxu0 0.0
  %824 = vmatpush1.msra.mxu0 0.0
  %825 = vmatprep.subr.mxu0 0.0
  %826 = vmatpush1.msra.mxu0 0.0
  %827 = vmatprep.subr.mxu0 0.0
  %828 = vmatpush1.msra.mxu0 0.0
  %829 = vmatprep.subr.mxu0 0.0
  %830 = vmatpush1.msra.mxu0 0.0
  %831 = vmatprep.subr.mxu0 0.0
  %832 = vmatpush1.msra.mxu0 0.0
  %833 = vmatprep.subr.mxu0 0.0
  %834 = vmatpush1.msra.mxu0 0.0
  %835 = vmatprep.subr.mxu0 0.0
  %836 = vmatpush1.msra.mxu0 0.0
  %837 = vmatprep.subr.mxu0 0.0
  %838 = vmatpush1.msra.mxu0 0.0
  %839 = vmatprep.subr.mxu0 0.0
  %840 = vmatpush1.msra.mxu0 0.0
  %841 = vmatprep.subr.mxu0 0.0
  %842 = vmatpush1.msra.mxu0 0.0
  %843 = vmatprep.subr.mxu0 0.0
  %844 = vmatpush1.msra.mxu0 0.0
  %845 = vmatprep.subr.mxu0 0.0
  %846 = vmatpush1.msra.mxu0 0.0
  %847 = vmatprep.subr.mxu0 0.0
  %848 = vmatpush1.msra.mxu0 0.0
  %849 = vmatprep.subr.mxu0 0.0
  %850 = vmatpush1.msra.mxu0 0.0
  %851 = vmatprep.subr.mxu0 0.0
  %852 = vmatpush1.msra.mxu0 0.0
  %853 = vmatprep.subr.mxu0 0.0
  %854 = vmatpush1.msra.mxu0 0.0
  %855 = vmatprep.subr.mxu0 0.0
  %856 = vmatpush1.msra.mxu0 0.0
  %857 = vmatprep.subr.mxu0 0.0
  %858 = vmatpush1.msra.mxu0 0.0
  %859 = vmatprep.subr.mxu0 0.0
  %860 = vmatpush1.msra.mxu0 0.0
  %861 = vmatprep.subr.mxu0 0.0
  %862 = vmatpush1.msra.mxu0 0.0
  %863 = vmatprep.subr.mxu0 0.0
  %864 = vmatpush1.msra.mxu0 0.0
  %865 = vmatprep.subr.mxu0 0.0
  %866 = vmatpush1.msra.mxu0 0.0
  %867 = vmatprep.subr.mxu0 0.0
  %868 = vmatpush1.msra.mxu0 0.0
  %869 = vmatprep.subr.mxu0 0.0
  %870 = vmatpush1.msra.mxu0 0.0
  %871 = vmatprep.subr.mxu0 0.0
  %872 = vmatpush1.msra.mxu0 0.0
  %873 = vmatprep.mubr.f32.mxu0 0.0
  %874 = vmatmul.mubr.f32.gmra.mrb[0].mxu0 %v736
  %v875 = vpop.f32.mrb[0].mxu0
  %v876 = vadd.f32 0.0, %v875
  %v877 = vpop.f32.mrb[0].mxu0
  %v878 = vadd.f32 0.0, %v877
  %879 = vdwg.mxu0
  %v880 = vadd.f32 %v148, %v805
  %v881 = vadd.f32 %v150, %v807
  %v882 = vadd.f32 %v225, %v876
  %v883 = vadd.f32 %v227, %v878
  %v884 = vrot.slane %v240, 2
  %v886 = vmul.f32 %v45, %v884
  %888 = vset.pattern.permute.xlu0 0
  %889 = vperm.xlu0 %888, %v886
  %v890 = vpop.permute.xlu0 %889
  %v892 = vmul.f32 %v890, %v255
  %v893 = vmul.f32 %v890, %v259
  %v894 = vmul.f32 %v890, %v263
  %v895 = vmul.f32 %v890, %v267
  %v900 = vrot.slane %v892, 6
  %v901 = vrot.slane %v893, 6
  %v902 = vrot.slane %v894, 6
  %v903 = vrot.slane %v895, 6
  %v908 = vadd.f32 %v880, %v900
  %v909 = vadd.f32 %v881, %v901
  %v910 = vadd.f32 %v882, %v902
  %v911 = vadd.f32 %v883, %v903
  %v912 = vmul.f32 %v908, 0.5
  %v913 = vtanh.pop %v912
  %v914 = vadd.f32 %v913, 1.0
  %v915 = vmul.f32 %v914, 0.5
  %v916 = vmul.f32 %v909, 0.5
  %v917 = vtanh.pop %v916
  %v918 = vadd.f32 %v917, 1.0
  %v919 = vmul.f32 %v918, 0.5
  %v920 = vtanh.pop %v910
  %v921 = vmul.f32 %v911, 0.5
  %v922 = vtanh.pop %v921
  %v923 = vadd.f32 %v922, 1.0
  %v924 = vmul.f32 %v923, 0.5
  %v926 = vrot.slane %v731, 6
  %v928 = vmul.f32 %v919, %v926
  %v929 = vmul.f32 %v915, %v920
  %v930 = vadd.f32 %v928, %v929
  %v931 = vtanh.pop %v930
  %v932 = vmul.f32 %v924, %v931
  %v934 = vsel %vm312, %v932, 0
  %936 = vmatprep.subr.mxu0 %v12
  %937 = vmatpush1.msra.mxu0 %v11
  %938 = vmatprep.subr.mxu0 %v16
  %939 = vmatpush1.msra.mxu0 %v15
  %940 = vmatprep.subr.mxu0 %v20
  %941 = vmatpush1.msra.mxu0 %v19
  %942 = vmatprep.subr.mxu0 %v24
  %943 = vmatpush1.msra.mxu0 %v23
  %944 = vmatprep.subr.mxu0 %v28
  %945 = vmatpush1.msra.mxu0 %v27
  %946 = vmatprep.subr.mxu0 0.0
  %947 = vmatpush1.msra.mxu0 0.0
  %948 = vmatprep.subr.mxu0 0.0
  %949 = vmatpush1.msra.mxu0 0.0
  %950 = vmatprep.subr.mxu0 0.0
  %951 = vmatpush1.msra.mxu0 0.0
  %952 = vmatprep.subr.mxu0 0.0
  %953 = vmatpush1.msra.mxu0 0.0
  %954 = vmatprep.subr.mxu0 0.0
  %955 = vmatpush1.msra.mxu0 0.0
  %956 = vmatprep.subr.mxu0 0.0
  %957 = vmatpush1.msra.mxu0 0.0
  %958 = vmatprep.subr.mxu0 0.0
  %959 = vmatpush1.msra.mxu0 0.0
  %960 = vmatprep.subr.mxu0 0.0
  %961 = vmatpush1.msra.mxu0 0.0
  %962 = vmatprep.subr.mxu0 0.0
  %963 = vmatpush1.msra.mxu0 0.0
  %964 = vmatprep.subr.mxu0 0.0
  %965 = vmatpush1.msra.mxu0 0.0
  %966 = vmatprep.subr.mxu0 0.0
  %967 = vmatpush1.msra.mxu0 0.0
  %968 = vmatprep.subr.mxu0 0.0
  %969 = vmatpush1.msra.mxu0 0.0
  %970 = vmatprep.subr.mxu0 0.0
  %971 = vmatpush1.msra.mxu0 0.0
  %972 = vmatprep.subr.mxu0 0.0
  %973 = vmatpush1.msra.mxu0 0.0
  %974 = vmatprep.subr.mxu0 0.0
  %975 = vmatpush1.msra.mxu0 0.0
  %976 = vmatprep.subr.mxu0 0.0
  %977 = vmatpush1.msra.mxu0 0.0
  %978 = vmatprep.subr.mxu0 0.0
  %979 = vmatpush1.msra.mxu0 0.0
  %980 = vmatprep.subr.mxu0 0.0
  %981 = vmatpush1.msra.mxu0 0.0
  %982 = vmatprep.subr.mxu0 0.0
  %983 = vmatpush1.msra.mxu0 0.0
  %984 = vmatprep.subr.mxu0 0.0
  %985 = vmatpush1.msra.mxu0 0.0
  %986 = vmatprep.subr.mxu0 0.0
  %987 = vmatpush1.msra.mxu0 0.0
  %988 = vmatprep.subr.mxu0 0.0
  %989 = vmatpush1.msra.mxu0 0.0
  %990 = vmatprep.subr.mxu0 0.0
  %991 = vmatpush1.msra.mxu0 0.0
  %992 = vmatprep.subr.mxu0 0.0
  %993 = vmatpush1.msra.mxu0 0.0
  %994 = vmatprep.subr.mxu0 0.0
  %995 = vmatpush1.msra.mxu0 0.0
  %996 = vmatprep.subr.mxu0 0.0
  %997 = vmatpush1.msra.mxu0 0.0
  %998 = vmatprep.subr.mxu0 0.0
  %999 = vmatpush1.msra.mxu0 0.0
  %1000 = vmatprep.mubr.f32.mxu0 0.0
  %1001 = vmatmul.mubr.f32.gmra.mrb[0].mxu0 %v934
  %v1002 = vpop.f32.mrb[0].mxu0
  %v1003 = vadd.f32 0.0, %v1002
  %v1004 = vpop.f32.mrb[0].mxu0
  %v1005 = vadd.f32 0.0, %v1004
  %1006 = vdwg.mxu0
  %1007 = vmatprep.subr.mxu0 %v14
  %1008 = vmatpush1.msra.mxu0 %v13
  %1009 = vmatprep.subr.mxu0 %v18
  %1010 = vmatpush1.msra.mxu0 %v17
  %1011 = vmatprep.subr.mxu0 %v22
  %1012 = vmatpush1.msra.mxu0 %v21
  %1013 = vmatprep.subr.mxu0 %v26
  %1014 = vmatpush1.msra.mxu0 %v25
  %1015 = vmatprep.subr.mxu0 %v30
  %1016 = vmatpush1.msra.mxu0 %v29
  %1017 = vmatprep.subr.mxu0 0.0
  %1018 = vmatpush1.msra.mxu0 0.0
  %1019 = vmatprep.subr.mxu0 0.0
  %1020 = vmatpush1.msra.mxu0 0.0
  %1021 = vmatprep.subr.mxu0 0.0
  %1022 = vmatpush1.msra.mxu0 0.0
  %1023 = vmatprep.subr.mxu0 0.0
  %1024 = vmatpush1.msra.mxu0 0.0
  %1025 = vmatprep.subr.mxu0 0.0
  %1026 = vmatpush1.msra.mxu0 0.0
  %1027 = vmatprep.subr.mxu0 0.0
  %1028 = vmatpush1.msra.mxu0 0.0
  %1029 = vmatprep.subr.mxu0 0.0
  %1030 = vmatpush1.msra.mxu0 0.0
  %1031 = vmatprep.subr.mxu0 0.0
  %1032 = vmatpush1.msra.mxu0 0.0
  %1033 = vmatprep.subr.mxu0 0.0
  %1034 = vmatpush1.msra.mxu0 0.0
  %1035 = vmatprep.subr.mxu0 0.0
  %1036 = vmatpush1.msra.mxu0 0.0
  %1037 = vmatprep.subr.mxu0 0.0
  %1038 = vmatpush1.msra.mxu0 0.0
  %1039 = vmatprep.subr.mxu0 0.0
  %1040 = vmatpush1.msra.mxu0 0.0
  %1041 = vmatprep.subr.mxu0 0.0
  %1042 = vmatpush1.msra.mxu0 0.0
  %1043 = vmatprep.subr.mxu0 0.0
  %1044 = vmatpush1.msra.mxu0 0.0
  %1045 = vmatprep.subr.mxu0 0.0
  %1046 = vmatpush1.msra.mxu0 0.0
  %1047 = vmatprep.subr.mxu0 0.0
  %1048 = vmatpush1.msra.mxu0 0.0
  %1049 = vmatprep.subr.mxu0 0.0
  %1050 = vmatpush1.msra.mxu0 0.0
  %1051 = vmatprep.subr.mxu0 0.0
  %1052 = vmatpush1.msra.mxu0 0.0
  %1053 = vmatprep.subr.mxu0 0.0
  %1054 = vmatpush1.msra.mxu0 0.0
  %1055 = vmatprep.subr.mxu0 0.0
  %1056 = vmatpush1.msra.mxu0 0.0
  %1057 = vmatprep.subr.mxu0 0.0
  %1058 = vmatpush1.msra.mxu0 0.0
  %1059 = vmatprep.subr.mxu0 0.0
  %1060 = vmatpush1.msra.mxu0 0.0
  %1061 = vmatprep.subr.mxu0 0.0
  %1062 = vmatpush1.msra.mxu0 0.0
  %1063 = vmatprep.subr.mxu0 0.0
  %1064 = vmatpush1.msra.mxu0 0.0
  %1065 = vmatprep.subr.mxu0 0.0
  %1066 = vmatpush1.msra.mxu0 0.0
  %1067 = vmatprep.subr.mxu0 0.0
  %1068 = vmatpush1.msra.mxu0 0.0
  %1069 = vmatprep.subr.mxu0 0.0
  %1070 = vmatpush1.msra.mxu0 0.0
  %1071 = vmatprep.mubr.f32.mxu0 0.0
  %1072 = vmatmul.mubr.f32.gmra.mrb[0].mxu0 %v934
  %v1073 = vpop.f32.mrb[0].mxu0
  %v1074 = vadd.f32 0.0, %v1073
  %v1075 = vpop.f32.mrb[0].mxu0
  %v1076 = vadd.f32 0.0, %v1075
  %1077 = vdwg.mxu0
  %1078 = vmatprep.subr.mxu0 0.0
  %1079 = vmatpush1.msra.mxu0 %v31
  %1080 = vmatprep.subr.mxu0 0.0
  %1081 = vmatpush1.msra.mxu0 %v32
  %1082 = vmatprep.subr.mxu0 0.0
  %1083 = vmatpush1.msra.mxu0 %v33
  %1084 = vmatprep.subr.mxu0 0.0
  %1085 = vmatpush1.msra.mxu0 %v34
  %1086 = vmatprep.subr.mxu0 0.0
  %1087 = vmatpush1.msra.mxu0 %v35
  %1088 = vmatprep.subr.mxu0 0.0
  %1089 = vmatpush1.msra.mxu0 0.0
  %1090 = vmatprep.subr.mxu0 0.0
  %1091 = vmatpush1.msra.mxu0 0.0
  %1092 = vmatprep.subr.mxu0 0.0
  %1093 = vmatpush1.msra.mxu0 0.0
  %1094 = vmatprep.subr.mxu0 0.0
  %1095 = vmatpush1.msra.mxu0 0.0
  %1096 = vmatprep.subr.mxu0 0.0
  %1097 = vmatpush1.msra.mxu0 0.0
  %1098 = vmatprep.subr.mxu0 0.0
  %1099 = vmatpush1.msra.mxu0 0.0
  %1100 = vmatprep.subr.mxu0 0.0
  %1101 = vmatpush1.msra.mxu0 0.0
  %1102 = vmatprep.subr.mxu0 0.0
  %1103 = vmatpush1.msra.mxu0 0.0
  %1104 = vmatprep.subr.mxu0 0.0
  %1105 = vmatpush1.msra.mxu0 0.0
  %1106 = vmatprep.subr.mxu0 0.0
  %1107 = vmatpush1.msra.mxu0 0.0
  %1108 = vmatprep.subr.mxu0 0.0
  %1109 = vmatpush1.msra.mxu0 0.0
  %1110 = vmatprep.subr.mxu0 0.0
  %1111 = vmatpush1.msra.mxu0 0.0
  %1112 = vmatprep.subr.mxu0 0.0
  %1113 = vmatpush1.msra.mxu0 0.0
  %1114 = vmatprep.subr.mxu0 0.0
  %1115 = vmatpush1.msra.mxu0 0.0
  %1116 = vmatprep.subr.mxu0 0.0
  %1117 = vmatpush1.msra.mxu0 0.0
  %1118 = vmatprep.subr.mxu0 0.0
  %1119 = vmatpush1.msra.mxu0 0.0
  %1120 = vmatprep.subr.mxu0 0.0
  %1121 = vmatpush1.msra.mxu0 0.0
  %1122 = vmatprep.subr.mxu0 0.0
  %1123 = vmatpush1.msra.mxu0 0.0
  %1124 = vmatprep.subr.mxu0 0.0
  %1125 = vmatpush1.msra.mxu0 0.0
  %1126 = vmatprep.subr.mxu0 0.0
  %1127 = vmatpush1.msra.mxu0 0.0
  %1128 = vmatprep.subr.mxu0 0.0
  %1129 = vmatpush1.msra.mxu0 0.0
  %1130 = vmatprep.subr.mxu0 0.0
  %1131 = vmatpush1.msra.mxu0 0.0
  %1132 = vmatprep.subr.mxu0 0.0
  %1133 = vmatpush1.msra.mxu0 0.0
  %1134 = vmatprep.subr.mxu0 0.0
  %1135 = vmatpush1.msra.mxu0 0.0
  %1136 = vmatprep.subr.mxu0 0.0
  %1137 = vmatpush1.msra.mxu0 0.0
  %1138 = vmatprep.subr.mxu0 0.0
  %1139 = vmatpush1.msra.mxu0 0.0
  %1140 = vmatprep.subr.mxu0 0.0
  %1141 = vmatpush1.msra.mxu0 0.0
  %1142 = vmatprep.mubr.f32.mxu0 0.0
  %1143 = vmatmul.mubr.f32.gmra.mrb[0].mxu0 %v934
  %v1144 = vpop.f32.mrb[0].mxu0
  %v1145 = vadd.f32 0.0, %v1144
  %v1146 = vpop.f32.mrb[0].mxu0
  %1147 = vdwg.mxu0
  %v1148 = vadd.f32 %v1145, %v44
  %v1149 = vmax.f32 %v1148, 0.0
  %v1150 = vand.u32 2147483647, %v1148
  %v1151 = vsub.f32 0.0, %v1150
  %v1152 = vmul.f32 %v1151, 1.442695
  %v1153 = vpow.pop %v1152
  %v1154 = vadd.f32 %v1153, 1.0
  %v1155 = vlog2.pop %v1154
  %v1156 = vmul.f32 %v1155, 0.6931472
  %v1157 = vadd.f32 %v1149, %v1156
  %1158 = vrot.lane.b32.xlu0 %v46, 125
  %v1159 = vpop.permute.xlu0 %1158
  %v1161 = vmul.f32 %v1157, %v1159
  %1163 = vrot.lane.b32.xlu0 %v1161, 127
  %v1164 = vpop.permute.xlu0 %1163
  %v1166 = vadd.f32 %v1148, %v1164
  %v1167 = vmul.f32 %v1166, %v239
  %v1168 = vmul.f32 %v1148, %v239
  %1170 = vrot.lane.b32.xlu0 %v239, 1
  %v1171 = vpop.permute.xlu0 %1170
  %v1173 = vmul.f32 %v1157, %v1171
  %v1178 = vrot.slane %v1003, 6
  %v1179 = vrot.slane %v1005, 6
  %v1180 = vrot.slane %v1074, 6
  %v1181 = vrot.slane %v1076, 6
  %v1186 = vadd.f32 %v148, %v1178
  %v1187 = vadd.f32 %v150, %v1179
  %v1188 = vadd.f32 %v225, %v1180
  %v1189 = vadd.f32 %v227, %v1181
  %v1190 = vmul.f32 %v1166, %v240
  %1192 = vset.pattern.permute.xlu0 0
  %1193 = vperm.xlu0 %1192, %v1190
  %v1194 = vpop.permute.xlu0 %1193
  %v1196 = vmul.f32 %v1194, %v255
  %v1197 = vmul.f32 %v1194, %v259
  %v1198 = vmul.f32 %v1194, %v263
  %v1199 = vmul.f32 %v1194, %v267
  %v1204 = vrot.slane %v1196, 6
  %v1205 = vrot.slane %v1197, 6
  %v1206 = vrot.slane %v1198, 6
  %v1207 = vrot.slane %v1199, 6
  %v1212 = vadd.f32 %v1186, %v1204
  %v1213 = vadd.f32 %v1187, %v1205
  %v1214 = vadd.f32 %v1188, %v1206
  %v1215 = vadd.f32 %v1189, %v1207
  %v1216 = vmul.f32 %v1212, 0.5
  %v1217 = vtanh.pop %v1216
  %v1218 = vadd.f32 %v1217, 1.0
  %v1219 = vmul.f32 %v1218, 0.5
  %v1220 = vmul.f32 %v1213, 0.5
  %v1221 = vtanh.pop %v1220
  %v1222 = vadd.f32 %v1221, 1.0
  %v1223 = vmul.f32 %v1222, 0.5
  %v1224 = vtanh.pop %v1214
  %v1225 = vmul.f32 %v1215, 0.5
  %v1226 = vtanh.pop %v1225
  %v1227 = vadd.f32 %v1226, 1.0
  %v1228 = vmul.f32 %v1227, 0.5
  %v1230 = vrot.slane %v930, 6
  %v1232 = vmul.f32 %v1223, %v1230
  %v1233 = vmul.f32 %v1219, %v1224
  %v1234 = vadd.f32 %v1232, %v1233
  %v1235 = vtanh.pop %v1234
  %v1236 = vmul.f32 %v1228, %v1235
  %v1238 = vrot.slane %v1236, 2
  %v1239 = vsel %vm312, %v1238, 0
  %1241 = vmatprep.subr.mxu0 %v12
  %1242 = vmatpush1.msra.mxu0 %v11
  %1243 = vmatprep.subr.mxu0 %v16
  %1244 = vmatpush1.msra.mxu0 %v15
  %1245 = vmatprep.subr.mxu0 %v20
  %1246 = vmatpush1.msra.mxu0 %v19
  %1247 = vmatprep.subr.mxu0 %v24
  %1248 = vmatpush1.msra.mxu0 %v23
  %1249 = vmatprep.subr.mxu0 %v28
  %1250 = vmatpush1.msra.mxu0 %v27
  %1251 = vmatprep.subr.mxu0 0.0
  %1252 = vmatpush1.msra.mxu0 0.0
  %1253 = vmatprep.subr.mxu0 0.0
  %1254 = vmatpush1.msra.mxu0 0.0
  %1255 = vmatprep.subr.mxu0 0.0
  %1256 = vmatpush1.msra.mxu0 0.0
  %1257 = vmatprep.subr.mxu0 0.0
  %1258 = vmatpush1.msra.mxu0 0.0
  %1259 = vmatprep.subr.mxu0 0.0
  %1260 = vmatpush1.msra.mxu0 0.0
  %1261 = vmatprep.subr.mxu0 0.0
  %1262 = vmatpush1.msra.mxu0 0.0
  %1263 = vmatprep.subr.mxu0 0.0
  %1264 = vmatpush1.msra.mxu0 0.0
  %1265 = vmatprep.subr.mxu0 0.0
  %1266 = vmatpush1.msra.mxu0 0.0
  %1267 = vmatprep.subr.mxu0 0.0
  %1268 = vmatpush1.msra.mxu0 0.0
  %1269 = vmatprep.subr.mxu0 0.0
  %1270 = vmatpush1.msra.mxu0 0.0
  %1271 = vmatprep.subr.mxu0 0.0
  %1272 = vmatpush1.msra.mxu0 0.0
  %1273 = vmatprep.subr.mxu0 0.0
  %1274 = vmatpush1.msra.mxu0 0.0
  %1275 = vmatprep.subr.mxu0 0.0
  %1276 = vmatpush1.msra.mxu0 0.0
  %1277 = vmatprep.subr.mxu0 0.0
  %1278 = vmatpush1.msra.mxu0 0.0
  %1279 = vmatprep.subr.mxu0 0.0
  %1280 = vmatpush1.msra.mxu0 0.0
  %1281 = vmatprep.subr.mxu0 0.0
  %1282 = vmatpush1.msra.mxu0 0.0
  %1283 = vmatprep.subr.mxu0 0.0
  %1284 = vmatpush1.msra.mxu0 0.0
  %1285 = vmatprep.subr.mxu0 0.0
  %1286 = vmatpush1.msra.mxu0 0.0
  %1287 = vmatprep.subr.mxu0 0.0
  %1288 = vmatpush1.msra.mxu0 0.0
  %1289 = vmatprep.subr.mxu0 0.0
  %1290 = vmatpush1.msra.mxu0 0.0
  %1291 = vmatprep.subr.mxu0 0.0
  %1292 = vmatpush1.msra.mxu0 0.0
  %1293 = vmatprep.subr.mxu0 0.0
  %1294 = vmatpush1.msra.mxu0 0.0
  %1295 = vmatprep.subr.mxu0 0.0
  %1296 = vmatpush1.msra.mxu0 0.0
  %1297 = vmatprep.subr.mxu0 0.0
  %1298 = vmatpush1.msra.mxu0 0.0
  %1299 = vmatprep.subr.mxu0 0.0
  %1300 = vmatpush1.msra.mxu0 0.0
  %1301 = vmatprep.subr.mxu0 0.0
  %1302 = vmatpush1.msra.mxu0 0.0
  %1303 = vmatprep.subr.mxu0 0.0
  %1304 = vmatpush1.msra.mxu0 0.0
  %1305 = vmatprep.mubr.f32.mxu0 0.0
  %1306 = vmatmul.mubr.f32.gmra.mrb[0].mxu0 %v1239
  %v1307 = vpop.f32.mrb[0].mxu0
  %v1308 = vadd.f32 0.0, %v1307
  %v1309 = vpop.f32.mrb[0].mxu0
  %v1310 = vadd.f32 0.0, %v1309
  %1311 = vdwg.mxu0
  %1312 = vmatprep.subr.mxu0 %v14
  %1313 = vmatpush1.msra.mxu0 %v13
  %1314 = vmatprep.subr.mxu0 %v18
  %1315 = vmatpush1.msra.mxu0 %v17
  %1316 = vmatprep.subr.mxu0 %v22
  %1317 = vmatpush1.msra.mxu0 %v21
  %1318 = vmatprep.subr.mxu0 %v26
  %1319 = vmatpush1.msra.mxu0 %v25
  %1320 = vmatprep.subr.mxu0 %v30
  %1321 = vmatpush1.msra.mxu0 %v29
  %1322 = vmatprep.subr.mxu0 0.0
  %1323 = vmatpush1.msra.mxu0 0.0
  %1324 = vmatprep.subr.mxu0 0.0
  %1325 = vmatpush1.msra.mxu0 0.0
  %1326 = vmatprep.subr.mxu0 0.0
  %1327 = vmatpush1.msra.mxu0 0.0
  %1328 = vmatprep.subr.mxu0 0.0
  %1329 = vmatpush1.msra.mxu0 0.0
  %1330 = vmatprep.subr.mxu0 0.0
  %1331 = vmatpush1.msra.mxu0 0.0
  %1332 = vmatprep.subr.mxu0 0.0
  %1333 = vmatpush1.msra.mxu0 0.0
  %1334 = vmatprep.subr.mxu0 0.0
  %1335 = vmatpush1.msra.mxu0 0.0
  %1336 = vmatprep.subr.mxu0 0.0
  %1337 = vmatpush1.msra.mxu0 0.0
  %1338 = vmatprep.subr.mxu0 0.0
  %1339 = vmatpush1.msra.mxu0 0.0
  %1340 = vmatprep.subr.mxu0 0.0
  %1341 = vmatpush1.msra.mxu0 0.0
  %1342 = vmatprep.subr.mxu0 0.0
  %1343 = vmatpush1.msra.mxu0 0.0
  %1344 = vmatprep.subr.mxu0 0.0
  %1345 = vmatpush1.msra.mxu0 0.0
  %1346 = vmatprep.subr.mxu0 0.0
  %1347 = vmatpush1.msra.mxu0 0.0
  %1348 = vmatprep.subr.mxu0 0.0
  %1349 = vmatpush1.msra.mxu0 0.0
  %1350 = vmatprep.subr.mxu0 0.0
  %1351 = vmatpush1.msra.mxu0 0.0
  %1352 = vmatprep.subr.mxu0 0.0
  %1353 = vmatpush1.msra.mxu0 0.0
  %1354 = vmatprep.subr.mxu0 0.0
  %1355 = vmatpush1.msra.mxu0 0.0
  %1356 = vmatprep.subr.mxu0 0.0
  %1357 = vmatpush1.msra.mxu0 0.0
  %1358 = vmatprep.subr.mxu0 0.0
  %1359 = vmatpush1.msra.mxu0 0.0
  %1360 = vmatprep.subr.mxu0 0.0
  %1361 = vmatpush1.msra.mxu0 0.0
  %1362 = vmatprep.subr.mxu0 0.0
  %1363 = vmatpush1.msra.mxu0 0.0
  %1364 = vmatprep.subr.mxu0 0.0
  %1365 = vmatpush1.msra.mxu0 0.0
  %1366 = vmatprep.subr.mxu0 0.0
  %1367 = vmatpush1.msra.mxu0 0.0
  %1368 = vmatprep.subr.mxu0 0.0
  %1369 = vmatpush1.msra.mxu0 0.0
  %1370 = vmatprep.subr.mxu0 0.0
  %1371 = vmatpush1.msra.mxu0 0.0
  %1372 = vmatprep.subr.mxu0 0.0
  %1373 = vmatpush1.msra.mxu0 0.0
  %1374 = vmatprep.subr.mxu0 0.0
  %1375 = vmatpush1.msra.mxu0 0.0
  %1376 = vmatprep.mubr.f32.mxu0 0.0
  %1377 = vmatmul.mubr.f32.gmra.mrb[0].mxu0 %v1239
  %v1378 = vpop.f32.mrb[0].mxu0
  %v1379 = vadd.f32 0.0, %v1378
  %v1380 = vpop.f32.mrb[0].mxu0
  %v1381 = vadd.f32 0.0, %v1380
  %1382 = vdwg.mxu0
  %1383 = vmatprep.subr.mxu0 0.0
  %1384 = vmatpush1.msra.mxu0 %v31
  %1385 = vmatprep.subr.mxu0 0.0
  %1386 = vmatpush1.msra.mxu0 %v32
  %1387 = vmatprep.subr.mxu0 0.0
  %1388 = vmatpush1.msra.mxu0 %v33
  %1389 = vmatprep.subr.mxu0 0.0
  %1390 = vmatpush1.msra.mxu0 %v34
  %1391 = vmatprep.subr.mxu0 0.0
  %1392 = vmatpush1.msra.mxu0 %v35
  %1393 = vmatprep.subr.mxu0 0.0
  %1394 = vmatpush1.msra.mxu0 0.0
  %1395 = vmatprep.subr.mxu0 0.0
  %1396 = vmatpush1.msra.mxu0 0.0
  %1397 = vmatprep.subr.mxu0 0.0
  %1398 = vmatpush1.msra.mxu0 0.0
  %1399 = vmatprep.subr.mxu0 0.0
  %1400 = vmatpush1.msra.mxu0 0.0
  %1401 = vmatprep.subr.mxu0 0.0
  %1402 = vmatpush1.msra.mxu0 0.0
  %1403 = vmatprep.subr.mxu0 0.0
  %1404 = vmatpush1.msra.mxu0 0.0
  %1405 = vmatprep.subr.mxu0 0.0
  %1406 = vmatpush1.msra.mxu0 0.0
  %1407 = vmatprep.subr.mxu0 0.0
  %1408 = vmatpush1.msra.mxu0 0.0
  %1409 = vmatprep.subr.mxu0 0.0
  %1410 = vmatpush1.msra.mxu0 0.0
  %1411 = vmatprep.subr.mxu0 0.0
  %1412 = vmatpush1.msra.mxu0 0.0
  %1413 = vmatprep.subr.mxu0 0.0
  %1414 = vmatpush1.msra.mxu0 0.0
  %1415 = vmatprep.subr.mxu0 0.0
  %1416 = vmatpush1.msra.mxu0 0.0
  %1417 = vmatprep.subr.mxu0 0.0
  %1418 = vmatpush1.msra.mxu0 0.0
  %1419 = vmatprep.subr.mxu0 0.0
  %1420 = vmatpush1.msra.mxu0 0.0
  %1421 = vmatprep.subr.mxu0 0.0
  %1422 = vmatpush1.msra.mxu0 0.0
  %1423 = vmatprep.subr.mxu0 0.0
  %1424 = vmatpush1.msra.mxu0 0.0
  %1425 = vmatprep.subr.mxu0 0.0
  %1426 = vmatpush1.msra.mxu0 0.0
  %1427 = vmatprep.subr.mxu0 0.0
  %1428 = vmatpush1.msra.mxu0 0.0
  %1429 = vmatprep.subr.mxu0 0.0
  %1430 = vmatpush1.msra.mxu0 0.0
  %1431 = vmatprep.subr.mxu0 0.0
  %1432 = vmatpush1.msra.mxu0 0.0
  %1433 = vmatprep.subr.mxu0 0.0
  %1434 = vmatpush1.msra.mxu0 0.0
  %1435 = vmatprep.subr.mxu0 0.0
  %1436 = vmatpush1.msra.mxu0 0.0
  %1437 = vmatprep.subr.mxu0 0.0
  %1438 = vmatpush1.msra.mxu0 0.0
  %1439 = vmatprep.subr.mxu0 0.0
  %1440 = vmatpush1.msra.mxu0 0.0
  %1441 = vmatprep.subr.mxu0 0.0
  %1442 = vmatpush1.msra.mxu0 0.0
  %1443 = vmatprep.subr.mxu0 0.0
  %1444 = vmatpush1.msra.mxu0 0.0
  %1445 = vmatprep.subr.mxu0 0.0
  %1446 = vmatpush1.msra.mxu0 0.0
  %1447 = vmatprep.mubr.f32.mxu0 0.0
  %1448 = vmatmul.mubr.f32.gmra.mrb[0].mxu0 %v1239
  %v1449 = vpop.f32.mrb[0].mxu0
  %v1450 = vadd.f32 0.0, %v1449
  %v1451 = vpop.f32.mrb[0].mxu0
  %1452 = vdwg.mxu0
  %v1453 = vadd.f32 %v1450, %v44
  %v1454 = vmax.f32 %v1453, 0.0
  %v1455 = vand.u32 2147483647, %v1453
  %v1456 = vsub.f32 0.0, %v1455
  %v1457 = vmul.f32 %v1456, 1.442695
  %v1458 = vpow.pop %v1457
  %v1459 = vadd.f32 %v1458, 1.0
  %v1460 = vlog2.pop %v1459
  %v1461 = vmul.f32 %v1460, 0.6931472
  %v1462 = vadd.f32 %v1454, %v1461
  %v1463 = vrot.slane %v46, 2
  %1464 = vrot.lane.b32.xlu0 %v1463, 125
  %v1465 = vpop.permute.xlu0 %1464
  %v1467 = vmul.f32 %v1462, %v1465
  %1469 = vrot.lane.b32.xlu0 %v1467, 127
  %v1470 = vpop.permute.xlu0 %1469
  %v1472 = vadd.f32 %v1453, %v1470
  %v1473 = vmul.f32 %v1472, %v239
  %v1474 = vmul.f32 %v1453, %v239
  %v1475 = vmul.f32 %v1462, %v1171
  %v1480 = vrot.slane %v1308, 4
  %v1481 = vrot.slane %v1310, 4
  %v1482 = vrot.slane %v1379, 4
  %v1483 = vrot.slane %v1381, 4
  %v1488 = vadd.f32 %v148, %v1480
  %v1489 = vadd.f32 %v150, %v1481
  %v1490 = vadd.f32 %v225, %v1482
  %v1491 = vadd.f32 %v227, %v1483
  %v1492 = vmul.f32 %v1472, %v240
  %1494 = vset.pattern.permute.xlu0 0
  %1495 = vperm.xlu0 %1494, %v1492
  %v1496 = vpop.permute.xlu0 %1495
  %v1498 = vmul.f32 %v1496, %v255
  %v1499 = vmul.f32 %v1496, %v259
  %v1500 = vmul.f32 %v1496, %v263
  %v1501 = vmul.f32 %v1496, %v267
  %v1506 = vrot.slane %v1498, 4
  %v1507 = vrot.slane %v1499, 4
  %v1508 = vrot.slane %v1500, 4
  %v1509 = vrot.slane %v1501, 4
  %v1514 = vadd.f32 %v1488, %v1506
  %v1515 = vadd.f32 %v1489, %v1507
  %v1516 = vadd.f32 %v1490, %v1508
  %v1517 = vadd.f32 %v1491, %v1509
  %v1518 = vmul.f32 %v1514, 0.5
  %v1519 = vtanh.pop %v1518
  %v1520 = vadd.f32 %v1519, 1.0
  %v1521 = vmul.f32 %v1520, 0.5
  %v1522 = vmul.f32 %v1515, 0.5
  %v1523 = vtanh.pop %v1522
  %v1524 = vadd.f32 %v1523, 1.0
  %v1525 = vmul.f32 %v1524, 0.5
  %v1526 = vtanh.pop %v1516
  %v1527 = vmul.f32 %v1517, 0.5
  %v1528 = vtanh.pop %v1527
  %v1529 = vadd.f32 %v1528, 1.0
  %v1530 = vmul.f32 %v1529, 0.5
  %v1532 = vrot.slane %v1234, 6
  %v1534 = vmul.f32 %v1525, %v1532
  %v1535 = vmul.f32 %v1521, %v1526
  %v1536 = vadd.f32 %v1534, %v1535
  %v1537 = vtanh.pop %v1536
  %v1538 = vmul.f32 %v1530, %v1537
  %v1540 = vrot.slane %v1538, 4
  %v1541 = vsel %vm312, %v1540, 0
  %1543 = vmatprep.subr.mxu0 %v12
  %1544 = vmatpush1.msra.mxu0 %v11
  %1545 = vmatprep.subr.mxu0 %v16
  %1546 = vmatpush1.msra.mxu0 %v15
  %1547 = vmatprep.subr.mxu0 %v20
  %1548 = vmatpush1.msra.mxu0 %v19
  %1549 = vmatprep.subr.mxu0 %v24
  %1550 = vmatpush1.msra.mxu0 %v23
  %1551 = vmatprep.subr.mxu0 %v28
  %1552 = vmatpush1.msra.mxu0 %v27
  %1553 = vmatprep.subr.mxu0 0.0
  %1554 = vmatpush1.msra.mxu0 0.0
  %1555 = vmatprep.subr.mxu0 0.0
  %1556 = vmatpush1.msra.mxu0 0.0
  %1557 = vmatprep.subr.mxu0 0.0
  %1558 = vmatpush1.msra.mxu0 0.0
  %1559 = vmatprep.subr.mxu0 0.0
  %1560 = vmatpush1.msra.mxu0 0.0
  %1561 = vmatprep.subr.mxu0 0.0
  %1562 = vmatpush1.msra.mxu0 0.0
  %1563 = vmatprep.subr.mxu0 0.0
  %1564 = vmatpush1.msra.mxu0 0.0
  %1565 = vmatprep.subr.mxu0 0.0
  %1566 = vmatpush1.msra.mxu0 0.0
  %1567 = vmatprep.subr.mxu0 0.0
  %1568 = vmatpush1.msra.mxu0 0.0
  %1569 = vmatprep.subr.mxu0 0.0
  %1570 = vmatpush1.msra.mxu0 0.0
  %1571 = vmatprep.subr.mxu0 0.0
  %1572 = vmatpush1.msra.mxu0 0.0
  %1573 = vmatprep.subr.mxu0 0.0
  %1574 = vmatpush1.msra.mxu0 0.0
  %1575 = vmatprep.subr.mxu0 0.0
  %1576 = vmatpush1.msra.mxu0 0.0
  %1577 = vmatprep.subr.mxu0 0.0
  %1578 = vmatpush1.msra.mxu0 0.0
  %1579 = vmatprep.subr.mxu0 0.0
  %1580 = vmatpush1.msra.mxu0 0.0
  %1581 = vmatprep.subr.mxu0 0.0
  %1582 = vmatpush1.msra.mxu0 0.0
  %1583 = vmatprep.subr.mxu0 0.0
  %1584 = vmatpush1.msra.mxu0 0.0
  %1585 = vmatprep.subr.mxu0 0.0
  %1586 = vmatpush1.msra.mxu0 0.0
  %1587 = vmatprep.subr.mxu0 0.0
  %1588 = vmatpush1.msra.mxu0 0.0
  %1589 = vmatprep.subr.mxu0 0.0
  %1590 = vmatpush1.msra.mxu0 0.0
  %1591 = vmatprep.subr.mxu0 0.0
  %1592 = vmatpush1.msra.mxu0 0.0
  %1593 = vmatprep.subr.mxu0 0.0
  %1594 = vmatpush1.msra.mxu0 0.0
  %1595 = vmatprep.subr.mxu0 0.0
  %1596 = vmatpush1.msra.mxu0 0.0
  %1597 = vmatprep.subr.mxu0 0.0
  %1598 = vmatpush1.msra.mxu0 0.0
  %1599 = vmatprep.subr.mxu0 0.0
  %1600 = vmatpush1.msra.mxu0 0.0
  %1601 = vmatprep.subr.mxu0 0.0
  %1602 = vmatpush1.msra.mxu0 0.0
  %1603 = vmatprep.subr.mxu0 0.0
  %1604 = vmatpush1.msra.mxu0 0.0
  %1605 = vmatprep.subr.mxu0 0.0
  %1606 = vmatpush1.msra.mxu0 0.0
  %1607 = vmatprep.mubr.f32.mxu0 0.0
  %1608 = vmatmul.mubr.f32.gmra.mrb[0].mxu0 %v1541
  %v1609 = vpop.f32.mrb[0].mxu0
  %v1610 = vadd.f32 0.0, %v1609
  %v1611 = vpop.f32.mrb[0].mxu0
  %v1612 = vadd.f32 0.0, %v1611
  %1613 = vdwg.mxu0
  %1614 = vmatprep.subr.mxu0 %v14
  %1615 = vmatpush1.msra.mxu0 %v13
  %1616 = vmatprep.subr.mxu0 %v18
  %1617 = vmatpush1.msra.mxu0 %v17
  %1618 = vmatprep.subr.mxu0 %v22
  %1619 = vmatpush1.msra.mxu0 %v21
  %1620 = vmatprep.subr.mxu0 %v26
  %1621 = vmatpush1.msra.mxu0 %v25
  %1622 = vmatprep.subr.mxu0 %v30
  %1623 = vmatpush1.msra.mxu0 %v29
  %1624 = vmatprep.subr.mxu0 0.0
  %1625 = vmatpush1.msra.mxu0 0.0
  %1626 = vmatprep.subr.mxu0 0.0
  %1627 = vmatpush1.msra.mxu0 0.0
  %1628 = vmatprep.subr.mxu0 0.0
  %1629 = vmatpush1.msra.mxu0 0.0
  %1630 = vmatprep.subr.mxu0 0.0
  %1631 = vmatpush1.msra.mxu0 0.0
  %1632 = vmatprep.subr.mxu0 0.0
  %1633 = vmatpush1.msra.mxu0 0.0
  %1634 = vmatprep.subr.mxu0 0.0
  %1635 = vmatpush1.msra.mxu0 0.0
  %1636 = vmatprep.subr.mxu0 0.0
  %1637 = vmatpush1.msra.mxu0 0.0
  %1638 = vmatprep.subr.mxu0 0.0
  %1639 = vmatpush1.msra.mxu0 0.0
  %1640 = vmatprep.subr.mxu0 0.0
  %1641 = vmatpush1.msra.mxu0 0.0
  %1642 = vmatprep.subr.mxu0 0.0
  %1643 = vmatpush1.msra.mxu0 0.0
  %1644 = vmatprep.subr.mxu0 0.0
  %1645 = vmatpush1.msra.mxu0 0.0
  %1646 = vmatprep.subr.mxu0 0.0
  %1647 = vmatpush1.msra.mxu0 0.0
  %1648 = vmatprep.subr.mxu0 0.0
  %1649 = vmatpush1.msra.mxu0 0.0
  %1650 = vmatprep.subr.mxu0 0.0
  %1651 = vmatpush1.msra.mxu0 0.0
  %1652 = vmatprep.subr.mxu0 0.0
  %1653 = vmatpush1.msra.mxu0 0.0
  %1654 = vmatprep.subr.mxu0 0.0
  %1655 = vmatpush1.msra.mxu0 0.0
  %1656 = vmatprep.subr.mxu0 0.0
  %1657 = vmatpush1.msra.mxu0 0.0
  %1658 = vmatprep.subr.mxu0 0.0
  %1659 = vmatpush1.msra.mxu0 0.0
  %1660 = vmatprep.subr.mxu0 0.0
  %1661 = vmatpush1.msra.mxu0 0.0
  %1662 = vmatprep.subr.mxu0 0.0
  %1663 = vmatpush1.msra.mxu0 0.0
  %1664 = vmatprep.subr.mxu0 0.0
  %1665 = vmatpush1.msra.mxu0 0.0
  %1666 = vmatprep.subr.mxu0 0.0
  %1667 = vmatpush1.msra.mxu0 0.0
  %1668 = vmatprep.subr.mxu0 0.0
  %1669 = vmatpush1.msra.mxu0 0.0
  %1670 = vmatprep.subr.mxu0 0.0
  %1671 = vmatpush1.msra.mxu0 0.0
  %1672 = vmatprep.subr.mxu0 0.0
  %1673 = vmatpush1.msra.mxu0 0.0
  %1674 = vmatprep.subr.mxu0 0.0
  %1675 = vmatpush1.msra.mxu0 0.0
  %1676 = vmatprep.subr.mxu0 0.0
  %1677 = vmatpush1.msra.mxu0 0.0
  %1678 = vmatprep.mubr.f32.mxu0 0.0
  %1679 = vmatmul.mubr.f32.gmra.mrb[0].mxu0 %v1541
  %v1680 = vpop.f32.mrb[0].mxu0
  %v1681 = vadd.f32 0.0, %v1680
  %v1682 = vpop.f32.mrb[0].mxu0
  %v1683 = vadd.f32 0.0, %v1682
  %1684 = vdwg.mxu0
  %1685 = vmatprep.subr.mxu0 0.0
  %1686 = vmatpush1.msra.mxu0 %v31
  %1687 = vmatprep.subr.mxu0 0.0
  %1688 = vmatpush1.msra.mxu0 %v32
  %1689 = vmatprep.subr.mxu0 0.0
  %1690 = vmatpush1.msra.mxu0 %v33
  %1691 = vmatprep.subr.mxu0 0.0
  %1692 = vmatpush1.msra.mxu0 %v34
  %1693 = vmatprep.subr.mxu0 0.0
  %1694 = vmatpush1.msra.mxu0 %v35
  %1695 = vmatprep.subr.mxu0 0.0
  %1696 = vmatpush1.msra.mxu0 0.0
  %1697 = vmatprep.subr.mxu0 0.0
  %1698 = vmatpush1.msra.mxu0 0.0
  %1699 = vmatprep.subr.mxu0 0.0
  %1700 = vmatpush1.msra.mxu0 0.0
  %1701 = vmatprep.subr.mxu0 0.0
  %1702 = vmatpush1.msra.mxu0 0.0
  %1703 = vmatprep.subr.mxu0 0.0
  %1704 = vmatpush1.msra.mxu0 0.0
  %1705 = vmatprep.subr.mxu0 0.0
  %1706 = vmatpush1.msra.mxu0 0.0
  %1707 = vmatprep.subr.mxu0 0.0
  %1708 = vmatpush1.msra.mxu0 0.0
  %1709 = vmatprep.subr.mxu0 0.0
  %1710 = vmatpush1.msra.mxu0 0.0
  %1711 = vmatprep.subr.mxu0 0.0
  %1712 = vmatpush1.msra.mxu0 0.0
  %1713 = vmatprep.subr.mxu0 0.0
  %1714 = vmatpush1.msra.mxu0 0.0
  %1715 = vmatprep.subr.mxu0 0.0
  %1716 = vmatpush1.msra.mxu0 0.0
  %1717 = vmatprep.subr.mxu0 0.0
  %1718 = vmatpush1.msra.mxu0 0.0
  %1719 = vmatprep.subr.mxu0 0.0
  %1720 = vmatpush1.msra.mxu0 0.0
  %1721 = vmatprep.subr.mxu0 0.0
  %1722 = vmatpush1.msra.mxu0 0.0
  %1723 = vmatprep.subr.mxu0 0.0
  %1724 = vmatpush1.msra.mxu0 0.0
  %1725 = vmatprep.subr.mxu0 0.0
  %1726 = vmatpush1.msra.mxu0 0.0
  %1727 = vmatprep.subr.mxu0 0.0
  %1728 = vmatpush1.msra.mxu0 0.0
  %1729 = vmatprep.subr.mxu0 0.0
  %1730 = vmatpush1.msra.mxu0 0.0
  %1731 = vmatprep.subr.mxu0 0.0
  %1732 = vmatpush1.msra.mxu0 0.0
  %1733 = vmatprep.subr.mxu0 0.0
  %1734 = vmatpush1.msra.mxu0 0.0
  %1735 = vmatprep.subr.mxu0 0.0
  %1736 = vmatpush1.msra.mxu0 0.0
  %1737 = vmatprep.subr.mxu0 0.0
  %1738 = vmatpush1.msra.mxu0 0.0
  %1739 = vmatprep.subr.mxu0 0.0
  %1740 = vmatpush1.msra.mxu0 0.0
  %1741 = vmatprep.subr.mxu0 0.0
  %1742 = vmatpush1.msra.mxu0 0.0
  %1743 = vmatprep.subr.mxu0 0.0
  %1744 = vmatpush1.msra.mxu0 0.0
  %1745 = vmatprep.subr.mxu0 0.0
  %1746 = vmatpush1.msra.mxu0 0.0
  %1747 = vmatprep.subr.mxu0 0.0
  %1748 = vmatpush1.msra.mxu0 0.0
  %1749 = vmatprep.mubr.f32.mxu0 0.0
  %1750 = vmatmul.mubr.f32.gmra.mrb[0].mxu0 %v1541
  %v1751 = vpop.f32.mrb[0].mxu0
  %v1752 = vadd.f32 0.0, %v1751
  %v1753 = vpop.f32.mrb[0].mxu0
  %1754 = vdwg.mxu0
  %v1755 = vadd.f32 %v1752, %v44
  %v1756 = vmax.f32 %v1755, 0.0
  %v1757 = vand.u32 2147483647, %v1755
  %v1758 = vsub.f32 0.0, %v1757
  %v1759 = vmul.f32 %v1758, 1.442695
  %v1760 = vpow.pop %v1759
  %v1761 = vadd.f32 %v1760, 1.0
  %v1762 = vlog2.pop %v1761
  %v1763 = vmul.f32 %v1762, 0.6931472
  %v1764 = vadd.f32 %v1756, %v1763
  %v1765 = vrot.slane %v46, 4
  %1766 = vrot.lane.b32.xlu0 %v1765, 125
  %v1767 = vpop.permute.xlu0 %1766
  %v1769 = vmul.f32 %v1764, %v1767
  %1771 = vrot.lane.b32.xlu0 %v1769, 127
  %v1772 = vpop.permute.xlu0 %1771
  %v1774 = vadd.f32 %v1755, %v1772
  %v1775 = vmul.f32 %v1774, %v239
  %v1776 = vmul.f32 %v1755, %v239
  %v1777 = vmul.f32 %v1764, %v1171
  %v1782 = vrot.slane %v1610, 2
  %v1783 = vrot.slane %v1612, 2
  %v1784 = vrot.slane %v1681, 2
  %v1785 = vrot.slane %v1683, 2
  %v1790 = vadd.f32 %v148, %v1782
  %v1791 = vadd.f32 %v150, %v1783
  %v1792 = vadd.f32 %v225, %v1784
  %v1793 = vadd.f32 %v227, %v1785
  %v1794 = vmul.f32 %v1774, %v240
  %1796 = vset.pattern.permute.xlu0 0
  %1797 = vperm.xlu0 %1796, %v1794
  %v1798 = vpop.permute.xlu0 %1797
  %v1800 = vmul.f32 %v1798, %v255
  %v1801 = vmul.f32 %v1798, %v259
  %v1802 = vmul.f32 %v1798, %v263
  %v1803 = vmul.f32 %v1798, %v267
  %v1808 = vrot.slane %v1800, 2
  %v1809 = vrot.slane %v1801, 2
  %v1810 = vrot.slane %v1802, 2
  %v1811 = vrot.slane %v1803, 2
  %v1816 = vadd.f32 %v1790, %v1808
  %v1817 = vadd.f32 %v1791, %v1809
  %v1818 = vadd.f32 %v1792, %v1810
  %v1819 = vadd.f32 %v1793, %v1811
  %v1820 = vmul.f32 %v1816, 0.5
  %v1821 = vtanh.pop %v1820
  %v1822 = vadd.f32 %v1821, 1.0
  %v1823 = vmul.f32 %v1822, 0.5
  %v1824 = vmul.f32 %v1817, 0.5
  %v1825 = vtanh.pop %v1824
  %v1826 = vadd.f32 %v1825, 1.0
  %v1827 = vmul.f32 %v1826, 0.5
  %v1828 = vtanh.pop %v1818
  %v1829 = vmul.f32 %v1819, 0.5
  %v1830 = vtanh.pop %v1829
  %v1831 = vadd.f32 %v1830, 1.0
  %v1832 = vmul.f32 %v1831, 0.5
  %v1834 = vrot.slane %v1536, 6
  %v1836 = vmul.f32 %v1827, %v1834
  %v1837 = vmul.f32 %v1823, %v1828
  %v1838 = vadd.f32 %v1836, %v1837
  %v1839 = vtanh.pop %v1838
  %v1840 = vmul.f32 %v1832, %v1839
  %v1842 = vrot.slane %v1840, 6
  %v1843 = vsel %vm312, %v1842, 0
  %1845 = vmatprep.subr.mxu0 0.0
  %1846 = vmatpush1.msra.mxu0 %v31
  %1847 = vmatprep.subr.mxu0 0.0
  %1848 = vmatpush1.msra.mxu0 %v32
  %1849 = vmatprep.subr.mxu0 0.0
  %1850 = vmatpush1.msra.mxu0 %v33
  %1851 = vmatprep.subr.mxu0 0.0
  %1852 = vmatpush1.msra.mxu0 %v34
  %1853 = vmatprep.subr.mxu0 0.0
  %1854 = vmatpush1.msra.mxu0 %v35
  %1855 = vmatprep.subr.mxu0 0.0
  %1856 = vmatpush1.msra.mxu0 0.0
  %1857 = vmatprep.subr.mxu0 0.0
  %1858 = vmatpush1.msra.mxu0 0.0
  %1859 = vmatprep.subr.mxu0 0.0
  %1860 = vmatpush1.msra.mxu0 0.0
  %1861 = vmatprep.subr.mxu0 0.0
  %1862 = vmatpush1.msra.mxu0 0.0
  %1863 = vmatprep.subr.mxu0 0.0
  %1864 = vmatpush1.msra.mxu0 0.0
  %1865 = vmatprep.subr.mxu0 0.0
  %1866 = vmatpush1.msra.mxu0 0.0
  %1867 = vmatprep.subr.mxu0 0.0
  %1868 = vmatpush1.msra.mxu0 0.0
  %1869 = vmatprep.subr.mxu0 0.0
  %1870 = vmatpush1.msra.mxu0 0.0
  %1871 = vmatprep.subr.mxu0 0.0
  %1872 = vmatpush1.msra.mxu0 0.0
  %1873 = vmatprep.subr.mxu0 0.0
  %1874 = vmatpush1.msra.mxu0 0.0
  %1875 = vmatprep.subr.mxu0 0.0
  %1876 = vmatpush1.msra.mxu0 0.0
  %1877 = vmatprep.subr.mxu0 0.0
  %1878 = vmatpush1.msra.mxu0 0.0
  %1879 = vmatprep.subr.mxu0 0.0
  %1880 = vmatpush1.msra.mxu0 0.0
  %1881 = vmatprep.subr.mxu0 0.0
  %1882 = vmatpush1.msra.mxu0 0.0
  %1883 = vmatprep.subr.mxu0 0.0
  %1884 = vmatpush1.msra.mxu0 0.0
  %1885 = vmatprep.subr.mxu0 0.0
  %1886 = vmatpush1.msra.mxu0 0.0
  %1887 = vmatprep.subr.mxu0 0.0
  %1888 = vmatpush1.msra.mxu0 0.0
  %1889 = vmatprep.subr.mxu0 0.0
  %1890 = vmatpush1.msra.mxu0 0.0
  %1891 = vmatprep.subr.mxu0 0.0
  %1892 = vmatpush1.msra.mxu0 0.0
  %1893 = vmatprep.subr.mxu0 0.0
  %1894 = vmatpush1.msra.mxu0 0.0
  %1895 = vmatprep.subr.mxu0 0.0
  %1896 = vmatpush1.msra.mxu0 0.0
  %1897 = vmatprep.subr.mxu0 0.0
  %1898 = vmatpush1.msra.mxu0 0.0
  %1899 = vmatprep.subr.mxu0 0.0
  %1900 = vmatpush1.msra.mxu0 0.0
  %1901 = vmatprep.subr.mxu0 0.0
  %1902 = vmatpush1.msra.mxu0 0.0
  %1903 = vmatprep.subr.mxu0 0.0
  %1904 = vmatpush1.msra.mxu0 0.0
  %1905 = vmatprep.subr.mxu0 0.0
  %1906 = vmatpush1.msra.mxu0 0.0
  %1907 = vmatprep.subr.mxu0 0.0
  %1908 = vmatpush1.msra.mxu0 0.0
  %1909 = vmatprep.mubr.f32.mxu0 0.0
  %1910 = vmatmul.mubr.f32.gmra.mrb[0].mxu0 %v1843
  %v1911 = vpop.f32.mrb[0].mxu0
  %v1912 = vadd.f32 0.0, %v1911
  %v1913 = vpop.f32.mrb[0].mxu0
  %1914 = vdwg.mxu0
  %v1915 = vadd.f32 %v1912, %v44
  %v1916 = vmax.f32 %v1915, 0.0
  %v1917 = vand.u32 2147483647, %v1915
  %v1918 = vsub.f32 0.0, %v1917
  %v1919 = vmul.f32 %v1918, 1.442695
  %v1920 = vpow.pop %v1919
  %v1921 = vadd.f32 %v1920, 1.0
  %v1922 = vlog2.pop %v1921
  %v1923 = vmul.f32 %v1922, 0.6931472
  %v1924 = vadd.f32 %v1916, %v1923
  %v1925 = vrot.slane %v46, 6
  %1926 = vrot.lane.b32.xlu0 %v1925, 125
  %v1927 = vpop.permute.xlu0 %1926
  %v1929 = vmul.f32 %v1924, %v1927
  %1931 = vrot.lane.b32.xlu0 %v1929, 127
  %v1932 = vpop.permute.xlu0 %1931
  %v1934 = vadd.f32 %v1915, %v1932
  %v1935 = vmul.f32 %v1934, %v239
  %v1936 = vmul.f32 %v1915, %v239
  %v1937 = vmul.f32 %v1924, %v1171
  %1939 = vrot.lane.b32.xlu0 %v1473, 1
  %v1940 = vpop.permute.xlu0 %1939
  %1943 = vrot.lane.b32.xlu0 %v1775, 2
  %v1944 = vpop.permute.xlu0 %1943
  %1947 = vrot.lane.b32.xlu0 %v1935, 3
  %v1948 = vpop.permute.xlu0 %1947
  %1951 = vrot.lane.b32.xlu0 %v1168, 4
  %v1952 = vpop.permute.xlu0 %1951
  %1955 = vrot.lane.b32.xlu0 %v1474, 5
  %v1956 = vpop.permute.xlu0 %1955
  %1959 = vrot.lane.b32.xlu0 %v1776, 6
  %v1960 = vpop.permute.xlu0 %1959
  %1963 = vrot.lane.b32.xlu0 %v1936, 7
  %v1964 = vpop.permute.xlu0 %1963
  %1967 = vrot.lane.b32.xlu0 %v1173, 7
  %v1968 = vpop.permute.xlu0 %1967
  %1971 = vrot.lane.b32.xlu0 %v1475, 8
  %v1972 = vpop.permute.xlu0 %1971
  %1975 = vrot.lane.b32.xlu0 %v1777, 9
  %v1976 = vpop.permute.xlu0 %1975
  %1979 = vrot.lane.b32.xlu0 %v1937, 10
  %v1980 = vpop.permute.xlu0 %1979
  %vm1982 = vcmask 7168
  %v1983 = vsel %vm1982, %v1167, %v1940
  %vm1984 = vcmask 15360
  %v1985 = vsel %vm1984, %v1983, %v1944
  %vm1986 = vcmask 23552
  %v1987 = vsel %vm1986, %v1985, %v1948
  %vm1988 = vcmask 31744
  %v1989 = vsel %vm1988, %v1987, %v1952
  %vm1990 = vcmask 39936
  %v1991 = vsel %vm1990, %v1989, %v1956
  %vm1992 = vcmask 48128
  %v1993 = vsel %vm1992, %v1991, %v1960
  %vm1994 = vcmask 56320
  %v1995 = vsel %vm1994, %v1993, %v1964
  %v1996 = vsel %vm68, %v1995, %v1968
  %vm1997 = vcmask 72704
  %v1998 = vsel %vm1997, %v1996, %v1972
  %vm1999 = vcmask 80896
  %v2000 = vsel %vm1999, %v1998, %v1976
  %vm2001 = vcmask 89088
  %v2002 = vsel %vm2001, %v2000, %v1980
  %vm2003 = vcmask 91136
  %2004 = vst.msk [vmem:[%s2] sm:$0x3] %vm2003, %v2002
  // Predicated region
  $region10: #{deepar_forward.1} parent=0 // pred_check
    _
  $region11: #{deepar_forward.1} parent=0 // pred_check_branch
    %2006 = sbr.rel (0) target = $region13
  $region12: #{deepar_forward.1} parent=0 // pred_region
    _
  $region13: #{deepar_forward.1} parent=0 // pred_fallthru
    _
  // Predicated region
  $region14: #{deepar_forward.1} parent=0 // pred_check
    _
  $region15: #{deepar_forward.1} parent=0 // pred_check_branch
    %2008 = sbr.rel (0) target = $region17
  $region16: #{deepar_forward.1} parent=0 // pred_region
    _
  $region17: #{deepar_forward.1} parent=0 // pred_fallthru
    _

</llo_original>
